<compile_context>
chip_gen: v6e
topology: v6e:2x2x1
jax: 0.10.0
libtpu: 0.0.40
codegen_flags: <defaults>
</compile_context>

<pallas_src>
import math
from functools import partial

import numpy as np
import jax
import jax.numpy as jnp
from jax.experimental import pallas as pl
from jax.experimental.pallas import tpu as pltpu

# ----------------------------- configuration -------------------------------
N_NODES = 8          # number of DAG nodes (sequence length)
BATCH = 2
D_INPUT = 4
D_MODEL = 4
N_HEAD = 1
DIM_FF = 16
N_HIDDEN = 5
NUM_LAYERS = 3
POS_ENC_DIM = N_NODES   # default: len(dag.nodes)
LN_EPS = 1e-5
NEG_SLOPE = 0.01        # nn.LeakyReLU default

# per-layer bias/LayerNorm row layout (one slab row per layer):
#   [bq|bk|bv | bo | bf1 | bf2 | ln1_g | ln1_b | ln2_g | ln2_b]
O_BQKV = 0
O_BO = O_BQKV + 3 * D_MODEL
O_BF1 = O_BO + D_MODEL
O_BF2 = O_BF1 + DIM_FF
O_LN1G = O_BF2 + D_MODEL
O_LN1B = O_LN1G + D_MODEL
O_LN2G = O_LN1B + D_MODEL
O_LN2B = O_LN2G + D_MODEL
VEC_W = O_LN2B + D_MODEL

# per-layer weight block column layout: [wq*scale | wk | wv | wo | wf1]
W_QKV = 0
W_O = W_QKV + 3 * D_MODEL
W_F1 = W_O + D_MODEL
WCAT_W = W_F1 + DIM_FF


def _align8(r):
    return ((r + 7) // 8) * 8


def _make_layout(batch):
    """Row/col layout of the single packed parameter slab.  All row offsets are
    8-aligned so every in-kernel static slice starts on a sublane-tile edge."""
    bn = batch * N_NODES
    lay = {"bn": bn}
    lay["row_mask"] = 0
    lay["row_pos"] = _align8(bn)
    lay["row_win"] = lay["row_pos"] + _align8(bn)
    lay["row_wcat"] = lay["row_win"] + _align8(D_INPUT)
    lay["row_wf2"] = lay["row_wcat"] + _align8(D_MODEL) * NUM_LAYERS
    lay["row_vec"] = lay["row_wf2"] + _align8(DIM_FF) * NUM_LAYERS
    lay["row_head"] = lay["row_vec"] + _align8(NUM_LAYERS)
    lay["rows"] = lay["row_head"] + 8
    lay["width"] = _align8(max(bn, WCAT_W, VEC_W, N_HIDDEN))
    return lay


# ------------------------------- kernel ------------------------------------
def _build_kernel(lay, batch):
    bn = batch * N_NODES
    D, FF = D_MODEL, DIM_FF
    f32 = jnp.float32
    rm, rp, rw = lay["row_mask"], lay["row_pos"], lay["row_win"]
    rwc, rwf2, rv, rh = (lay["row_wcat"], lay["row_wf2"],
                         lay["row_vec"], lay["row_head"])

    def layer_norm(x, g, b):
        mu = jnp.mean(x, axis=-1, keepdims=True)
        var = jnp.mean((x - mu) ** 2, axis=-1, keepdims=True)
        return (x - mu) * jax.lax.rsqrt(var + LN_EPS) * g + b

    def kernel(x_ref, p_ref, out_ref):
        # x_ref : (B*N, d_input) flattened batch
        # p_ref : (rows, width)  packed constants/parameters
        # out_ref: (1, B*N)      lane-dense output row
        mask = p_ref[rm:rm + bn, 0:bn]          # block-diag additive attn mask
        pos = p_ref[rp:rp + bn, 0:D]            # pe @ w_pe + b_pe + b_in, tiled
        w_in = p_ref[rw:rw + D_INPUT, 0:D]

        # input_linear + (precomputed) laplacian positional encoding + b_in
        h = jnp.dot(x_ref[...], w_in, preferred_element_type=f32) + pos

        # TransformerEncoder: post-norm layers, relu FFN, single head
        for l in range(NUM_LAYERS):
            wcat = p_ref[rwc + _align8(D) * l:rwc + _align8(D) * l + D, 0:WCAT_W]
            wf2 = p_ref[rwf2 + _align8(FF) * l:rwf2 + _align8(FF) * l + FF, 0:D]
            vec = p_ref[rv + l:rv + l + 1, 0:VEC_W]

            # fused Q/K/V projection (q already pre-scaled by 1/sqrt(d_head))
            qkv = jnp.dot(h, wcat[:, W_QKV:W_O], preferred_element_type=f32) \
                + vec[:, O_BQKV:O_BO]                            # (B*N, 3D)
            q = qkv[:, 0:D]
            k = qkv[:, D:2 * D]
            v = qkv[:, 2 * D:3 * D]

            scores = jax.lax.dot_general(
                q, k, (((1,), (1,)), ((), ())), preferred_element_type=f32
            ) + mask                                             # (B*N, B*N)

            # explicit softmax: max-subtract, exp (EUP), approx reciprocal (EUP)
            m = jnp.max(scores, axis=-1, keepdims=True)
            e = jnp.exp(scores - m)
            s = jnp.sum(e, axis=-1, keepdims=True)
            pattn = e * pl.reciprocal(s, approx=True)

            attn = jnp.dot(pattn, v, preferred_element_type=f32)
            attn = jnp.dot(attn, wcat[:, W_O:W_F1], preferred_element_type=f32) \
                + vec[:, O_BO:O_BF1]
            h = layer_norm(h + attn, vec[:, O_LN1G:O_LN1B], vec[:, O_LN1B:O_LN2G])

            ff = jnp.dot(h, wcat[:, W_F1:WCAT_W], preferred_element_type=f32) \
                + vec[:, O_BF1:O_BF2]
            ff = jnp.maximum(ff, 0.0)                            # relu
            ff = jnp.dot(ff, wf2, preferred_element_type=f32) + vec[:, O_BF2:O_LN1G]
            h = layer_norm(h + ff, vec[:, O_LN2G:O_LN2B], vec[:, O_LN2B:VEC_W])

        # output head: linear1 -> LeakyReLU -> linear2, written lane-dense
        hs = p_ref[rh:rh + 8, 0:N_HIDDEN]
        wh1 = hs[0:D, :]                  # (D, n_hidden)
        bh1 = hs[D:D + 1, :]              # (1, n_hidden)
        wh2_row = hs[D + 1:D + 2, :]      # (1, n_hidden) == wh2^T
        bh2 = hs[D + 2:D + 3, 0:1]        # (1, 1)

        o = jnp.dot(h, wh1, preferred_element_type=f32) + bh1
        o = jnp.where(o >= 0.0, o, NEG_SLOPE * o)                # LeakyReLU
        out = jax.lax.dot_general(
            wh2_row, o, (((1,), (1,)), ((), ())), preferred_element_type=f32
        ) + bh2
        out_ref[...] = out

    return kernel


# ------------------------------- wrapper ------------------------------------
def pack_params(params, batch):
    """One-time packing of the logical parameter dict into a single slab."""
    p = params
    lay = _make_layout(batch)
    bn = lay["bn"]

    # constant positional-encoding projection, fused with the input bias,
    # tiled over batch (hoisted out of the kernel)
    pos = p["pe"] @ p["w_pe"] + p["b_pe"] + p["b_in"]            # (N, d_model)
    pos_flat = jnp.tile(pos, (batch, 1))                         # (B*N, d_model)

    # block-diagonal additive mask: per-sample DAG mask on the diagonal,
    # -1e9 everywhere else so the flattened (B*N) attention never mixes samples
    eye = jnp.eye(batch, dtype=jnp.float32)
    neg = jnp.full((N_NODES, N_NODES), -1e9, jnp.float32)
    mask_bd = jnp.kron(eye, p["mask"]) + jnp.kron(1.0 - eye, neg)

    scale = 1.0 / math.sqrt(D_MODEL // N_HEAD)   # folded into wq/bq once

    slab = jnp.zeros((lay["rows"], lay["width"]), jnp.float32)
    slab = slab.at[lay["row_mask"]:lay["row_mask"] + bn, 0:bn].set(mask_bd)
    slab = slab.at[lay["row_pos"]:lay["row_pos"] + bn, 0:D_MODEL].set(pos_flat)
    slab = slab.at[lay["row_win"]:lay["row_win"] + D_INPUT, 0:D_MODEL].set(p["w_in"])

    for l in range(NUM_LAYERS):
        wcat = jnp.concatenate([p["wq"][l] * scale, p["wk"][l], p["wv"][l],
                                p["wo"][l], p["wf1"][l]], axis=-1)   # (D, WCAT_W)
        r = lay["row_wcat"] + _align8(D_MODEL) * l
        slab = slab.at[r:r + D_MODEL, 0:WCAT_W].set(wcat)

        r = lay["row_wf2"] + _align8(DIM_FF) * l
        slab = slab.at[r:r + DIM_FF, 0:D_MODEL].set(p["wf2"][l])

        vec = jnp.concatenate([p["bq"][l] * scale, p["bk"][l], p["bv"][l],
                               p["bo"][l], p["bf1"][l], p["bf2"][l],
                               p["ln1_g"][l], p["ln1_b"][l],
                               p["ln2_g"][l], p["ln2_b"][l]], axis=-1)  # (1, VEC_W)
        r = lay["row_vec"] + l
        slab = slab.at[r:r + 1, 0:VEC_W].set(vec)

    rh = lay["row_head"]
    slab = slab.at[rh:rh + D_MODEL, 0:N_HIDDEN].set(p["wh1"])
    slab = slab.at[rh + D_MODEL, 0:N_HIDDEN].set(p["bh1"][0])
    slab = slab.at[rh + D_MODEL + 1, 0:N_HIDDEN].set(p["wh2"][:, 0])
    slab = slab.at[rh + D_MODEL + 2, 0].set(p["bh2"][0, 0])
    return slab


@partial(jax.jit, static_argnames=("batch",))
def _forward_jit(x, param_slab, batch):
    bn = batch * N_NODES
    lay = _make_layout(batch)
    kernel = _build_kernel(lay, batch)
    x_flat = x.reshape(bn, D_INPUT)

    # Single program (no grid): whole problem fits trivially in VMEM, so one
    # invocation avoids per-step pipeline overhead; only 2 input DMAs total.
    # TODO(synk): for very large batch, re-introduce a batch-block grid sized
    # against VMEM (64 MiB on v7x) instead of one monolithic program.
    vmem = pl.BlockSpec(memory_space=pltpu.MemorySpace.VMEM)
    out = pl.pallas_call(
        kernel,
        out_shape=jax.ShapeDtypeStruct((1, bn), jnp.float32),
        in_specs=[vmem, vmem],
        out_specs=vmem,
    )(x_flat, param_slab)
    return out.reshape(batch, N_NODES, 1)


def graph_transformer_forward(x, param_slab):
    return _forward_jit(x, param_slab, x.shape[0])


# ----------------------- DAG / mask / laplacian PE --------------------------
def build_graph_constants():
    adj = np.zeros((N_NODES, N_NODES), dtype=np.float32)
    edges = [(0, 1), (0, 2), (1, 3), (2, 3), (3, 4), (2, 5), (4, 6), (5, 6), (6, 7), (1, 7)]
    for i, j in edges:
        adj[i, j] = 1.0

    # generate_mask: diag(ones) + adj.T, then 0 -> -1e9, nonzero -> 0
    m = np.diag(np.ones(N_NODES)) + adj.T
    mask = np.where(m == 0, -1e9, 0.0).astype(np.float32)

    # laplacian PE of the undirected version of the DAG (eigh + fixed sign
    # convention for deterministic eigenvectors across platforms)
    a_sym = np.clip(adj + adj.T, 0.0, 1.0)
    lap = np.diag(a_sym.sum(axis=1)) - a_sym
    eigvals, eigvecs = np.linalg.eigh(lap)
    signs = np.sign(eigvecs[np.abs(eigvecs).argmax(axis=0), np.arange(N_NODES)])
    signs[signs == 0] = 1.0
    eigvecs = eigvecs * signs
    idx = eigvals.argsort()[::-1][:POS_ENC_DIM]
    pe = eigvecs[:, idx].astype(np.float32)                      # (N, pos_enc_dim)
    return jnp.asarray(mask), jnp.asarray(pe)


# --------------------------- parameter init ---------------------------------
def init_params(key):
    mask, pe = build_graph_constants()
    keys = iter(jax.random.split(key, 24))

    def uni(shape, scale):
        return jax.random.uniform(next(keys), shape, jnp.float32, -scale, scale)

    L = NUM_LAYERS
    s_in = 1.0 / math.sqrt(D_INPUT)
    s_pe = 1.0 / math.sqrt(POS_ENC_DIM)
    s_d = 1.0 / math.sqrt(D_MODEL)
    s_ff = 1.0 / math.sqrt(DIM_FF)

    p = {"mask": mask, "pe": pe}
    # weights stored as (in, out): y = x @ W + b  (== PyTorch x @ W_pt.T + b)
    p["w_in"] = uni((D_INPUT, D_MODEL), s_in)
    p["b_in"] = uni((1, D_MODEL), s_in)
    p["w_pe"] = uni((POS_ENC_DIM, D_MODEL), s_pe)
    p["b_pe"] = uni((1, D_MODEL), s_pe)
    p["wq"] = uni((L, D_MODEL, D_MODEL), s_d); p["bq"] = uni((L, 1, D_MODEL), s_d)
    p["wk"] = uni((L, D_MODEL, D_MODEL), s_d); p["bk"] = uni((L, 1, D_MODEL), s_d)
    p["wv"] = uni((L, D_MODEL, D_MODEL), s_d); p["bv"] = uni((L, 1, D_MODEL), s_d)
    p["wo"] = uni((L, D_MODEL, D_MODEL), s_d); p["bo"] = uni((L, 1, D_MODEL), s_d)
    p["wf1"] = uni((L, D_MODEL, DIM_FF), s_d); p["bf1"] = uni((L, 1, DIM_FF), s_d)
    p["wf2"] = uni((L, DIM_FF, D_MODEL), s_ff); p["bf2"] = uni((L, 1, D_MODEL), s_ff)
    # LayerNorm affine params init like PyTorch (ones / zeros)
    p["ln1_g"] = jnp.ones((L, 1, D_MODEL), jnp.float32)
    p["ln1_b"] = jnp.zeros((L, 1, D_MODEL), jnp.float32)
    p["ln2_g"] = jnp.ones((L, 1, D_MODEL), jnp.float32)
    p["ln2_b"] = jnp.zeros((L, 1, D_MODEL), jnp.float32)
    # init_weights(): head weights uniform(-0.1, 0.1), biases zero
    p["wh1"] = uni((D_MODEL, N_HIDDEN), 0.1)
    p["bh1"] = jnp.zeros((1, N_HIDDEN), jnp.float32)
    p["wh2"] = uni((N_HIDDEN, 1), 0.1)
    p["bh2"] = jnp.zeros((1, 1), jnp.float32)
    return p


# --------------------------- pure-JAX reference ------------------------------
def reference_forward(x, p):
    def ln(x, g, b):
        mu = jnp.mean(x, axis=-1, keepdims=True)
        var = jnp.mean((x - mu) ** 2, axis=-1, keepdims=True)
        return (x - mu) * jax.lax.rsqrt(var + LN_EPS) * g + b

    h = x @ p["w_in"] + p["b_in"]
    h = h + (p["pe"] @ p["w_pe"] + p["b_pe"])
    scale = 1.0 / math.sqrt(D_MODEL // N_HEAD)
    for l in range(NUM_LAYERS):
        q = h @ p["wq"][l] + p["bq"][l]
        k = h @ p["wk"][l] + p["bk"][l]
        v = h @ p["wv"][l] + p["bv"][l]
        scores = jnp.einsum("bqd,bkd->bqk", q, k) * scale + p["mask"]
        attn = jnp.einsum("bqk,bkd->bqd", jax.nn.softmax(scores, -1), v)
        attn = attn @ p["wo"][l] + p["bo"][l]
        h = ln(h + attn, p["ln1_g"][l], p["ln1_b"][l])
        ff = jnp.maximum(h @ p["wf1"][l] + p["bf1"][l], 0.0) @ p["wf2"][l] + p["bf2"][l]
        h = ln(h + ff, p["ln2_g"][l], p["ln2_b"][l])
    o = h @ p["wh1"] + p["bh1"]
    o = jnp.where(o >= 0.0, o, NEG_SLOPE * o)
    return o @ p["wh2"] + p["bh2"]


# --------------------------------- main --------------------------------------
if __name__ == "__main__":
    key = jax.random.PRNGKey(0)
    k_param, k_x = jax.random.split(key)
    params = init_params(k_param)
    x = jax.random.normal(k_x, (BATCH, N_NODES, D_INPUT), jnp.float32)

    # one-time parameter packing (outside the forward path)
    param_slab = jax.block_until_ready(pack_params(params, BATCH))

    out = graph_transformer_forward(x, param_slab)
    out = jax.block_until_ready(out)
    assert out.shape == (BATCH, N_NODES, 1)

    with jax.default_matmul_precision("highest"):
        ref = jax.block_until_ready(reference_forward(x, params))
    # tolerance slightly relaxed because softmax uses the EUP approximate
    # reciprocal (pl.reciprocal(..., approx=True)).
    np.testing.assert_allclose(np.asarray(out), np.asarray(ref), rtol=2e-3, atol=2e-3)

    print("KERNEL_OK")
</pallas_src>

<mosaic_0001>
module attributes {stable_mosaic.version = 11 : i64} {
  func.func @kernel(%arg0: memref<16x4xf32, #tpu.memory_space<vmem>>, %arg1: memref<128x56xf32, #tpu.memory_space<vmem>>, %arg2: memref<1x16xf32, #tpu.memory_space<vmem>>) attributes {dimension_semantics = [], scalar_prefetch = 0 : i64, scratch_operands = 0 : i64, tpu.core_type = #tpu.core_type<tc>} {
    %c0 = arith.constant 0 : index
    %c0_0 = arith.constant 0 : index
    %0 = vector.load %arg1[%c0, %c0_0] : memref<128x56xf32, #tpu.memory_space<vmem>>, vector<16x16xf32>
    %c16 = arith.constant 16 : index
    %c0_1 = arith.constant 0 : index
    %1 = vector.load %arg1[%c16, %c0_1] : memref<128x56xf32, #tpu.memory_space<vmem>>, vector<16x4xf32>
    %c32 = arith.constant 32 : index
    %c0_2 = arith.constant 0 : index
    %2 = vector.load %arg1[%c32, %c0_2] : memref<128x56xf32, #tpu.memory_space<vmem>>, vector<4x4xf32>
    %c0_3 = arith.constant 0 : index
    %c0_4 = arith.constant 0 : index
    %3 = vector.load %arg0[%c0_3, %c0_4] : memref<16x4xf32, #tpu.memory_space<vmem>>, vector<16x4xf32>
    %cst = arith.constant dense<0.000000e+00> : vector<16x4xf32>
    %4 = tpu.matmul %3, %2, %cst {dimension_numbers = #tpu.dot_dimension_numbers<[1], [0], [0], [1], [0, 0, 1, 1], [], []>} : vector<16x4xf32>, vector<4x4xf32>, vector<16x4xf32> -> vector<16x4xf32>
    %5 = arith.addf %4, %1 : vector<16x4xf32>
    %c40 = arith.constant 40 : index
    %c0_5 = arith.constant 0 : index
    %6 = vector.load %arg1[%c40, %c0_5] : memref<128x56xf32, #tpu.memory_space<vmem>>, vector<4x32xf32>
    %c64 = arith.constant 64 : index
    %c0_6 = arith.constant 0 : index
    %7 = vector.load %arg1[%c64, %c0_6] : memref<128x56xf32, #tpu.memory_space<vmem>>, vector<16x4xf32>
    %c112 = arith.constant 112 : index
    %c0_7 = arith.constant 0 : index
    %8 = vector.load %arg1[%c112, %c0_7] : memref<128x56xf32, #tpu.memory_space<vmem>>, vector<1x52xf32>
    %9 = vector.extract_strided_slice %6 {offsets = [0, 0], sizes = [4, 12], strides = [1, 1]} : vector<4x32xf32> to vector<4x12xf32>
    %cst_8 = arith.constant dense<0.000000e+00> : vector<16x12xf32>
    %10 = tpu.matmul %5, %9, %cst_8 {dimension_numbers = #tpu.dot_dimension_numbers<[1], [0], [0], [1], [0, 0, 1, 1], [], []>} : vector<16x4xf32>, vector<4x12xf32>, vector<16x12xf32> -> vector<16x12xf32>
    %11 = vector.extract_strided_slice %8 {offsets = [0, 0], sizes = [1, 12], strides = [1, 1]} : vector<1x52xf32> to vector<1x12xf32>
    %12 = vector.broadcast %11 : vector<1x12xf32> to vector<16x12xf32>
    %13 = arith.addf %10, %12 : vector<16x12xf32>
    %14 = vector.extract_strided_slice %13 {offsets = [0, 0], sizes = [16, 4], strides = [1, 1]} : vector<16x12xf32> to vector<16x4xf32>
    %15 = vector.extract_strided_slice %13 {offsets = [0, 4], sizes = [16, 4], strides = [1, 1]} : vector<16x12xf32> to vector<16x4xf32>
    %16 = vector.extract_strided_slice %13 {offsets = [0, 8], sizes = [16, 4], strides = [1, 1]} : vector<16x12xf32> to vector<16x4xf32>
    %cst_9 = arith.constant dense<0.000000e+00> : vector<16x16xf32>
    %17 = tpu.matmul %14, %15, %cst_9 {dimension_numbers = #tpu.dot_dimension_numbers<[1], [1], [0], [0], [0, 0, 1, 0], [], []>} : vector<16x4xf32>, vector<16x4xf32>, vector<16x16xf32> -> vector<16x16xf32>
    %18 = arith.addf %17, %0 : vector<16x16xf32>
    %cst_10 = arith.constant dense<0xFF800000> : vector<16xf32>
    %19 = vector.multi_reduction <maximumf>, %18, %cst_10 [1] : vector<16x16xf32> to vector<16xf32>
    %20 = vector.shape_cast %19 : vector<16xf32> to vector<16x1xf32>
    %21 = vector.broadcast %20 : vector<16x1xf32> to vector<16x16xf32>
    %22 = arith.subf %18, %21 : vector<16x16xf32>
    %23 = math.exp %22 : vector<16x16xf32>
    %cst_11 = arith.constant dense<0.000000e+00> : vector<16xf32>
    %24 = vector.multi_reduction <add>, %23, %cst_11 [1] : vector<16x16xf32> to vector<16xf32>
    %25 = vector.shape_cast %24 : vector<16xf32> to vector<16x1xf32>
    %26 = tpu.reciprocal %25 {approx = true} : vector<16x1xf32> -> vector<16x1xf32>
    %27 = vector.broadcast %26 : vector<16x1xf32> to vector<16x16xf32>
    %28 = arith.mulf %23, %27 : vector<16x16xf32>
    %cst_12 = arith.constant dense<0.000000e+00> : vector<16x4xf32>
    %29 = tpu.matmul %28, %16, %cst_12 {dimension_numbers = #tpu.dot_dimension_numbers<[1], [0], [0], [1], [0, 0, 1, 1], [], []>} : vector<16x16xf32>, vector<16x4xf32>, vector<16x4xf32> -> vector<16x4xf32>
    %30 = vector.extract_strided_slice %6 {offsets = [0, 12], sizes = [4, 4], strides = [1, 1]} : vector<4x32xf32> to vector<4x4xf32>
    %cst_13 = arith.constant dense<0.000000e+00> : vector<16x4xf32>
    %31 = tpu.matmul %29, %30, %cst_13 {dimension_numbers = #tpu.dot_dimension_numbers<[1], [0], [0], [1], [0, 0, 1, 1], [], []>} : vector<16x4xf32>, vector<4x4xf32>, vector<16x4xf32> -> vector<16x4xf32>
    %32 = vector.extract_strided_slice %8 {offsets = [0, 12], sizes = [1, 4], strides = [1, 1]} : vector<1x52xf32> to vector<1x4xf32>
    %33 = vector.broadcast %32 : vector<1x4xf32> to vector<16x4xf32>
    %34 = arith.addf %31, %33 : vector<16x4xf32>
    %35 = arith.addf %5, %34 : vector<16x4xf32>
    %36 = vector.extract_strided_slice %8 {offsets = [0, 36], sizes = [1, 4], strides = [1, 1]} : vector<1x52xf32> to vector<1x4xf32>
    %37 = vector.extract_strided_slice %8 {offsets = [0, 40], sizes = [1, 4], strides = [1, 1]} : vector<1x52xf32> to vector<1x4xf32>
    %cst_14 = arith.constant dense<0.000000e+00> : vector<16xf32>
    %38 = vector.multi_reduction <add>, %35, %cst_14 [1] : vector<16x4xf32> to vector<16xf32>
    %39 = vector.shape_cast %38 : vector<16xf32> to vector<16x1xf32>
    %cst_15 = arith.constant 4.000000e+00 : f32
    %40 = vector.broadcast %cst_15 : f32 to vector<16x1xf32>
    %41 = arith.divf %39, %40 : vector<16x1xf32>
    %42 = vector.broadcast %41 : vector<16x1xf32> to vector<16x4xf32>
    %43 = arith.subf %35, %42 : vector<16x4xf32>
    %44 = arith.mulf %43, %43 : vector<16x4xf32>
    %cst_16 = arith.constant dense<0.000000e+00> : vector<16xf32>
    %45 = vector.multi_reduction <add>, %44, %cst_16 [1] : vector<16x4xf32> to vector<16xf32>
    %46 = vector.shape_cast %45 : vector<16xf32> to vector<16x1xf32>
    %cst_17 = arith.constant 4.000000e+00 : f32
    %47 = vector.broadcast %cst_17 : f32 to vector<16x1xf32>
    %48 = arith.divf %46, %47 : vector<16x1xf32>
    %49 = vector.broadcast %41 : vector<16x1xf32> to vector<16x4xf32>
    %50 = arith.subf %35, %49 : vector<16x4xf32>
    %cst_18 = arith.constant 9.99999974E-6 : f32
    %51 = vector.broadcast %cst_18 : f32 to vector<16x1xf32>
    %52 = arith.addf %48, %51 : vector<16x1xf32>
    %53 = math.rsqrt %52 : vector<16x1xf32>
    %54 = vector.broadcast %53 : vector<16x1xf32> to vector<16x4xf32>
    %55 = arith.mulf %50, %54 : vector<16x4xf32>
    %56 = vector.broadcast %36 : vector<1x4xf32> to vector<16x4xf32>
    %57 = arith.mulf %55, %56 : vector<16x4xf32>
    %58 = vector.broadcast %37 : vector<1x4xf32> to vector<16x4xf32>
    %59 = arith.addf %57, %58 : vector<16x4xf32>
    %60 = vector.extract_strided_slice %6 {offsets = [0, 16], sizes = [4, 16], strides = [1, 1]} : vector<4x32xf32> to vector<4x16xf32>
    %cst_19 = arith.constant dense<0.000000e+00> : vector<16x16xf32>
    %61 = tpu.matmul %59, %60, %cst_19 {dimension_numbers = #tpu.dot_dimension_numbers<[1], [0], [0], [1], [0, 0, 1, 1], [], []>} : vector<16x4xf32>, vector<4x16xf32>, vector<16x16xf32> -> vector<16x16xf32>
    %62 = vector.extract_strided_slice %8 {offsets = [0, 16], sizes = [1, 16], strides = [1, 1]} : vector<1x52xf32> to vector<1x16xf32>
    %63 = vector.broadcast %62 : vector<1x16xf32> to vector<16x16xf32>
    %64 = arith.addf %61, %63 : vector<16x16xf32>
    %cst_20 = arith.constant 0.000000e+00 : f32
    %65 = vector.broadcast %cst_20 : f32 to vector<16x16xf32>
    %66 = arith.maximumf %64, %65 : vector<16x16xf32>
    %cst_21 = arith.constant dense<0.000000e+00> : vector<16x4xf32>
    %67 = tpu.matmul %66, %7, %cst_21 {dimension_numbers = #tpu.dot_dimension_numbers<[1], [0], [0], [1], [0, 0, 1, 1], [], []>} : vector<16x16xf32>, vector<16x4xf32>, vector<16x4xf32> -> vector<16x4xf32>
    %68 = vector.extract_strided_slice %8 {offsets = [0, 32], sizes = [1, 4], strides = [1, 1]} : vector<1x52xf32> to vector<1x4xf32>
    %69 = vector.broadcast %68 : vector<1x4xf32> to vector<16x4xf32>
    %70 = arith.addf %67, %69 : vector<16x4xf32>
    %71 = arith.addf %59, %70 : vector<16x4xf32>
    %72 = vector.extract_strided_slice %8 {offsets = [0, 44], sizes = [1, 4], strides = [1, 1]} : vector<1x52xf32> to vector<1x4xf32>
    %73 = vector.extract_strided_slice %8 {offsets = [0, 48], sizes = [1, 4], strides = [1, 1]} : vector<1x52xf32> to vector<1x4xf32>
    %cst_22 = arith.constant dense<0.000000e+00> : vector<16xf32>
    %74 = vector.multi_reduction <add>, %71, %cst_22 [1] : vector<16x4xf32> to vector<16xf32>
    %75 = vector.shape_cast %74 : vector<16xf32> to vector<16x1xf32>
    %cst_23 = arith.constant 4.000000e+00 : f32
    %76 = vector.broadcast %cst_23 : f32 to vector<16x1xf32>
    %77 = arith.divf %75, %76 : vector<16x1xf32>
    %78 = vector.broadcast %77 : vector<16x1xf32> to vector<16x4xf32>
    %79 = arith.subf %71, %78 : vector<16x4xf32>
    %80 = arith.mulf %79, %79 : vector<16x4xf32>
    %cst_24 = arith.constant dense<0.000000e+00> : vector<16xf32>
    %81 = vector.multi_reduction <add>, %80, %cst_24 [1] : vector<16x4xf32> to vector<16xf32>
    %82 = vector.shape_cast %81 : vector<16xf32> to vector<16x1xf32>
    %cst_25 = arith.constant 4.000000e+00 : f32
    %83 = vector.broadcast %cst_25 : f32 to vector<16x1xf32>
    %84 = arith.divf %82, %83 : vector<16x1xf32>
    %85 = vector.broadcast %77 : vector<16x1xf32> to vector<16x4xf32>
    %86 = arith.subf %71, %85 : vector<16x4xf32>
    %cst_26 = arith.constant 9.99999974E-6 : f32
    %87 = vector.broadcast %cst_26 : f32 to vector<16x1xf32>
    %88 = arith.addf %84, %87 : vector<16x1xf32>
    %89 = math.rsqrt %88 : vector<16x1xf32>
    %90 = vector.broadcast %89 : vector<16x1xf32> to vector<16x4xf32>
    %91 = arith.mulf %86, %90 : vector<16x4xf32>
    %92 = vector.broadcast %72 : vector<1x4xf32> to vector<16x4xf32>
    %93 = arith.mulf %91, %92 : vector<16x4xf32>
    %94 = vector.broadcast %73 : vector<1x4xf32> to vector<16x4xf32>
    %95 = arith.addf %93, %94 : vector<16x4xf32>
    %c48 = arith.constant 48 : index
    %c0_27 = arith.constant 0 : index
    %96 = vector.load %arg1[%c48, %c0_27] : memref<128x56xf32, #tpu.memory_space<vmem>>, vector<4x32xf32>
    %c80 = arith.constant 80 : index
    %c0_28 = arith.constant 0 : index
    %97 = vector.load %arg1[%c80, %c0_28] : memref<128x56xf32, #tpu.memory_space<vmem>>, vector<16x4xf32>
    %c113 = arith.constant 113 : index
    %c0_29 = arith.constant 0 : index
    %98 = vector.load %arg1[%c113, %c0_29] : memref<128x56xf32, #tpu.memory_space<vmem>>, vector<1x52xf32>
    %99 = vector.extract_strided_slice %96 {offsets = [0, 0], sizes = [4, 12], strides = [1, 1]} : vector<4x32xf32> to vector<4x12xf32>
    %cst_30 = arith.constant dense<0.000000e+00> : vector<16x12xf32>
    %100 = tpu.matmul %95, %99, %cst_30 {dimension_numbers = #tpu.dot_dimension_numbers<[1], [0], [0], [1], [0, 0, 1, 1], [], []>} : vector<16x4xf32>, vector<4x12xf32>, vector<16x12xf32> -> vector<16x12xf32>
    %101 = vector.extract_strided_slice %98 {offsets = [0, 0], sizes = [1, 12], strides = [1, 1]} : vector<1x52xf32> to vector<1x12xf32>
    %102 = vector.broadcast %101 : vector<1x12xf32> to vector<16x12xf32>
    %103 = arith.addf %100, %102 : vector<16x12xf32>
    %104 = vector.extract_strided_slice %103 {offsets = [0, 0], sizes = [16, 4], strides = [1, 1]} : vector<16x12xf32> to vector<16x4xf32>
    %105 = vector.extract_strided_slice %103 {offsets = [0, 4], sizes = [16, 4], strides = [1, 1]} : vector<16x12xf32> to vector<16x4xf32>
    %106 = vector.extract_strided_slice %103 {offsets = [0, 8], sizes = [16, 4], strides = [1, 1]} : vector<16x12xf32> to vector<16x4xf32>
    %cst_31 = arith.constant dense<0.000000e+00> : vector<16x16xf32>
    %107 = tpu.matmul %104, %105, %cst_31 {dimension_numbers = #tpu.dot_dimension_numbers<[1], [1], [0], [0], [0, 0, 1, 0], [], []>} : vector<16x4xf32>, vector<16x4xf32>, vector<16x16xf32> -> vector<16x16xf32>
    %108 = arith.addf %107, %0 : vector<16x16xf32>
    %cst_32 = arith.constant dense<0xFF800000> : vector<16xf32>
    %109 = vector.multi_reduction <maximumf>, %108, %cst_32 [1] : vector<16x16xf32> to vector<16xf32>
    %110 = vector.shape_cast %109 : vector<16xf32> to vector<16x1xf32>
    %111 = vector.broadcast %110 : vector<16x1xf32> to vector<16x16xf32>
    %112 = arith.subf %108, %111 : vector<16x16xf32>
    %113 = math.exp %112 : vector<16x16xf32>
    %cst_33 = arith.constant dense<0.000000e+00> : vector<16xf32>
    %114 = vector.multi_reduction <add>, %113, %cst_33 [1] : vector<16x16xf32> to vector<16xf32>
    %115 = vector.shape_cast %114 : vector<16xf32> to vector<16x1xf32>
    %116 = tpu.reciprocal %115 {approx = true} : vector<16x1xf32> -> vector<16x1xf32>
    %117 = vector.broadcast %116 : vector<16x1xf32> to vector<16x16xf32>
    %118 = arith.mulf %113, %117 : vector<16x16xf32>
    %cst_34 = arith.constant dense<0.000000e+00> : vector<16x4xf32>
    %119 = tpu.matmul %118, %106, %cst_34 {dimension_numbers = #tpu.dot_dimension_numbers<[1], [0], [0], [1], [0, 0, 1, 1], [], []>} : vector<16x16xf32>, vector<16x4xf32>, vector<16x4xf32> -> vector<16x4xf32>
    %120 = vector.extract_strided_slice %96 {offsets = [0, 12], sizes = [4, 4], strides = [1, 1]} : vector<4x32xf32> to vector<4x4xf32>
    %cst_35 = arith.constant dense<0.000000e+00> : vector<16x4xf32>
    %121 = tpu.matmul %119, %120, %cst_35 {dimension_numbers = #tpu.dot_dimension_numbers<[1], [0], [0], [1], [0, 0, 1, 1], [], []>} : vector<16x4xf32>, vector<4x4xf32>, vector<16x4xf32> -> vector<16x4xf32>
    %122 = vector.extract_strided_slice %98 {offsets = [0, 12], sizes = [1, 4], strides = [1, 1]} : vector<1x52xf32> to vector<1x4xf32>
    %123 = vector.broadcast %122 : vector<1x4xf32> to vector<16x4xf32>
    %124 = arith.addf %121, %123 : vector<16x4xf32>
    %125 = arith.addf %95, %124 : vector<16x4xf32>
    %126 = vector.extract_strided_slice %98 {offsets = [0, 36], sizes = [1, 4], strides = [1, 1]} : vector<1x52xf32> to vector<1x4xf32>
    %127 = vector.extract_strided_slice %98 {offsets = [0, 40], sizes = [1, 4], strides = [1, 1]} : vector<1x52xf32> to vector<1x4xf32>
    %cst_36 = arith.constant dense<0.000000e+00> : vector<16xf32>
    %128 = vector.multi_reduction <add>, %125, %cst_36 [1] : vector<16x4xf32> to vector<16xf32>
    %129 = vector.shape_cast %128 : vector<16xf32> to vector<16x1xf32>
    %cst_37 = arith.constant 4.000000e+00 : f32
    %130 = vector.broadcast %cst_37 : f32 to vector<16x1xf32>
    %131 = arith.divf %129, %130 : vector<16x1xf32>
    %132 = vector.broadcast %131 : vector<16x1xf32> to vector<16x4xf32>
    %133 = arith.subf %125, %132 : vector<16x4xf32>
    %134 = arith.mulf %133, %133 : vector<16x4xf32>
    %cst_38 = arith.constant dense<0.000000e+00> : vector<16xf32>
    %135 = vector.multi_reduction <add>, %134, %cst_38 [1] : vector<16x4xf32> to vector<16xf32>
    %136 = vector.shape_cast %135 : vector<16xf32> to vector<16x1xf32>
    %cst_39 = arith.constant 4.000000e+00 : f32
    %137 = vector.broadcast %cst_39 : f32 to vector<16x1xf32>
    %138 = arith.divf %136, %137 : vector<16x1xf32>
    %139 = vector.broadcast %131 : vector<16x1xf32> to vector<16x4xf32>
    %140 = arith.subf %125, %139 : vector<16x4xf32>
    %cst_40 = arith.constant 9.99999974E-6 : f32
    %141 = vector.broadcast %cst_40 : f32 to vector<16x1xf32>
    %142 = arith.addf %138, %141 : vector<16x1xf32>
    %143 = math.rsqrt %142 : vector<16x1xf32>
    %144 = vector.broadcast %143 : vector<16x1xf32> to vector<16x4xf32>
    %145 = arith.mulf %140, %144 : vector<16x4xf32>
    %146 = vector.broadcast %126 : vector<1x4xf32> to vector<16x4xf32>
    %147 = arith.mulf %145, %146 : vector<16x4xf32>
    %148 = vector.broadcast %127 : vector<1x4xf32> to vector<16x4xf32>
    %149 = arith.addf %147, %148 : vector<16x4xf32>
    %150 = vector.extract_strided_slice %96 {offsets = [0, 16], sizes = [4, 16], strides = [1, 1]} : vector<4x32xf32> to vector<4x16xf32>
    %cst_41 = arith.constant dense<0.000000e+00> : vector<16x16xf32>
    %151 = tpu.matmul %149, %150, %cst_41 {dimension_numbers = #tpu.dot_dimension_numbers<[1], [0], [0], [1], [0, 0, 1, 1], [], []>} : vector<16x4xf32>, vector<4x16xf32>, vector<16x16xf32> -> vector<16x16xf32>
    %152 = vector.extract_strided_slice %98 {offsets = [0, 16], sizes = [1, 16], strides = [1, 1]} : vector<1x52xf32> to vector<1x16xf32>
    %153 = vector.broadcast %152 : vector<1x16xf32> to vector<16x16xf32>
    %154 = arith.addf %151, %153 : vector<16x16xf32>
    %cst_42 = arith.constant 0.000000e+00 : f32
    %155 = vector.broadcast %cst_42 : f32 to vector<16x16xf32>
    %156 = arith.maximumf %154, %155 : vector<16x16xf32>
    %cst_43 = arith.constant dense<0.000000e+00> : vector<16x4xf32>
    %157 = tpu.matmul %156, %97, %cst_43 {dimension_numbers = #tpu.dot_dimension_numbers<[1], [0], [0], [1], [0, 0, 1, 1], [], []>} : vector<16x16xf32>, vector<16x4xf32>, vector<16x4xf32> -> vector<16x4xf32>
    %158 = vector.extract_strided_slice %98 {offsets = [0, 32], sizes = [1, 4], strides = [1, 1]} : vector<1x52xf32> to vector<1x4xf32>
    %159 = vector.broadcast %158 : vector<1x4xf32> to vector<16x4xf32>
    %160 = arith.addf %157, %159 : vector<16x4xf32>
    %161 = arith.addf %149, %160 : vector<16x4xf32>
    %162 = vector.extract_strided_slice %98 {offsets = [0, 44], sizes = [1, 4], strides = [1, 1]} : vector<1x52xf32> to vector<1x4xf32>
    %163 = vector.extract_strided_slice %98 {offsets = [0, 48], sizes = [1, 4], strides = [1, 1]} : vector<1x52xf32> to vector<1x4xf32>
    %cst_44 = arith.constant dense<0.000000e+00> : vector<16xf32>
    %164 = vector.multi_reduction <add>, %161, %cst_44 [1] : vector<16x4xf32> to vector<16xf32>
    %165 = vector.shape_cast %164 : vector<16xf32> to vector<16x1xf32>
    %cst_45 = arith.constant 4.000000e+00 : f32
    %166 = vector.broadcast %cst_45 : f32 to vector<16x1xf32>
    %167 = arith.divf %165, %166 : vector<16x1xf32>
    %168 = vector.broadcast %167 : vector<16x1xf32> to vector<16x4xf32>
    %169 = arith.subf %161, %168 : vector<16x4xf32>
    %170 = arith.mulf %169, %169 : vector<16x4xf32>
    %cst_46 = arith.constant dense<0.000000e+00> : vector<16xf32>
    %171 = vector.multi_reduction <add>, %170, %cst_46 [1] : vector<16x4xf32> to vector<16xf32>
    %172 = vector.shape_cast %171 : vector<16xf32> to vector<16x1xf32>
    %cst_47 = arith.constant 4.000000e+00 : f32
    %173 = vector.broadcast %cst_47 : f32 to vector<16x1xf32>
    %174 = arith.divf %172, %173 : vector<16x1xf32>
    %175 = vector.broadcast %167 : vector<16x1xf32> to vector<16x4xf32>
    %176 = arith.subf %161, %175 : vector<16x4xf32>
    %cst_48 = arith.constant 9.99999974E-6 : f32
    %177 = vector.broadcast %cst_48 : f32 to vector<16x1xf32>
    %178 = arith.addf %174, %177 : vector<16x1xf32>
    %179 = math.rsqrt %178 : vector<16x1xf32>
    %180 = vector.broadcast %179 : vector<16x1xf32> to vector<16x4xf32>
    %181 = arith.mulf %176, %180 : vector<16x4xf32>
    %182 = vector.broadcast %162 : vector<1x4xf32> to vector<16x4xf32>
    %183 = arith.mulf %181, %182 : vector<16x4xf32>
    %184 = vector.broadcast %163 : vector<1x4xf32> to vector<16x4xf32>
    %185 = arith.addf %183, %184 : vector<16x4xf32>
    %c56 = arith.constant 56 : index
    %c0_49 = arith.constant 0 : index
    %186 = vector.load %arg1[%c56, %c0_49] : memref<128x56xf32, #tpu.memory_space<vmem>>, vector<4x32xf32>
    %c96 = arith.constant 96 : index
    %c0_50 = arith.constant 0 : index
    %187 = vector.load %arg1[%c96, %c0_50] : memref<128x56xf32, #tpu.memory_space<vmem>>, vector<16x4xf32>
    %c114 = arith.constant 114 : index
    %c0_51 = arith.constant 0 : index
    %188 = vector.load %arg1[%c114, %c0_51] : memref<128x56xf32, #tpu.memory_space<vmem>>, vector<1x52xf32>
    %189 = vector.extract_strided_slice %186 {offsets = [0, 0], sizes = [4, 12], strides = [1, 1]} : vector<4x32xf32> to vector<4x12xf32>
    %cst_52 = arith.constant dense<0.000000e+00> : vector<16x12xf32>
    %190 = tpu.matmul %185, %189, %cst_52 {dimension_numbers = #tpu.dot_dimension_numbers<[1], [0], [0], [1], [0, 0, 1, 1], [], []>} : vector<16x4xf32>, vector<4x12xf32>, vector<16x12xf32> -> vector<16x12xf32>
    %191 = vector.extract_strided_slice %188 {offsets = [0, 0], sizes = [1, 12], strides = [1, 1]} : vector<1x52xf32> to vector<1x12xf32>
    %192 = vector.broadcast %191 : vector<1x12xf32> to vector<16x12xf32>
    %193 = arith.addf %190, %192 : vector<16x12xf32>
    %194 = vector.extract_strided_slice %193 {offsets = [0, 0], sizes = [16, 4], strides = [1, 1]} : vector<16x12xf32> to vector<16x4xf32>
    %195 = vector.extract_strided_slice %193 {offsets = [0, 4], sizes = [16, 4], strides = [1, 1]} : vector<16x12xf32> to vector<16x4xf32>
    %196 = vector.extract_strided_slice %193 {offsets = [0, 8], sizes = [16, 4], strides = [1, 1]} : vector<16x12xf32> to vector<16x4xf32>
    %cst_53 = arith.constant dense<0.000000e+00> : vector<16x16xf32>
    %197 = tpu.matmul %194, %195, %cst_53 {dimension_numbers = #tpu.dot_dimension_numbers<[1], [1], [0], [0], [0, 0, 1, 0], [], []>} : vector<16x4xf32>, vector<16x4xf32>, vector<16x16xf32> -> vector<16x16xf32>
    %198 = arith.addf %197, %0 : vector<16x16xf32>
    %cst_54 = arith.constant dense<0xFF800000> : vector<16xf32>
    %199 = vector.multi_reduction <maximumf>, %198, %cst_54 [1] : vector<16x16xf32> to vector<16xf32>
    %200 = vector.shape_cast %199 : vector<16xf32> to vector<16x1xf32>
    %201 = vector.broadcast %200 : vector<16x1xf32> to vector<16x16xf32>
    %202 = arith.subf %198, %201 : vector<16x16xf32>
    %203 = math.exp %202 : vector<16x16xf32>
    %cst_55 = arith.constant dense<0.000000e+00> : vector<16xf32>
    %204 = vector.multi_reduction <add>, %203, %cst_55 [1] : vector<16x16xf32> to vector<16xf32>
    %205 = vector.shape_cast %204 : vector<16xf32> to vector<16x1xf32>
    %206 = tpu.reciprocal %205 {approx = true} : vector<16x1xf32> -> vector<16x1xf32>
    %207 = vector.broadcast %206 : vector<16x1xf32> to vector<16x16xf32>
    %208 = arith.mulf %203, %207 : vector<16x16xf32>
    %cst_56 = arith.constant dense<0.000000e+00> : vector<16x4xf32>
    %209 = tpu.matmul %208, %196, %cst_56 {dimension_numbers = #tpu.dot_dimension_numbers<[1], [0], [0], [1], [0, 0, 1, 1], [], []>} : vector<16x16xf32>, vector<16x4xf32>, vector<16x4xf32> -> vector<16x4xf32>
    %210 = vector.extract_strided_slice %186 {offsets = [0, 12], sizes = [4, 4], strides = [1, 1]} : vector<4x32xf32> to vector<4x4xf32>
    %cst_57 = arith.constant dense<0.000000e+00> : vector<16x4xf32>
    %211 = tpu.matmul %209, %210, %cst_57 {dimension_numbers = #tpu.dot_dimension_numbers<[1], [0], [0], [1], [0, 0, 1, 1], [], []>} : vector<16x4xf32>, vector<4x4xf32>, vector<16x4xf32> -> vector<16x4xf32>
    %212 = vector.extract_strided_slice %188 {offsets = [0, 12], sizes = [1, 4], strides = [1, 1]} : vector<1x52xf32> to vector<1x4xf32>
    %213 = vector.broadcast %212 : vector<1x4xf32> to vector<16x4xf32>
    %214 = arith.addf %211, %213 : vector<16x4xf32>
    %215 = arith.addf %185, %214 : vector<16x4xf32>
    %216 = vector.extract_strided_slice %188 {offsets = [0, 36], sizes = [1, 4], strides = [1, 1]} : vector<1x52xf32> to vector<1x4xf32>
    %217 = vector.extract_strided_slice %188 {offsets = [0, 40], sizes = [1, 4], strides = [1, 1]} : vector<1x52xf32> to vector<1x4xf32>
    %cst_58 = arith.constant dense<0.000000e+00> : vector<16xf32>
    %218 = vector.multi_reduction <add>, %215, %cst_58 [1] : vector<16x4xf32> to vector<16xf32>
    %219 = vector.shape_cast %218 : vector<16xf32> to vector<16x1xf32>
    %cst_59 = arith.constant 4.000000e+00 : f32
    %220 = vector.broadcast %cst_59 : f32 to vector<16x1xf32>
    %221 = arith.divf %219, %220 : vector<16x1xf32>
    %222 = vector.broadcast %221 : vector<16x1xf32> to vector<16x4xf32>
    %223 = arith.subf %215, %222 : vector<16x4xf32>
    %224 = arith.mulf %223, %223 : vector<16x4xf32>
    %cst_60 = arith.constant dense<0.000000e+00> : vector<16xf32>
    %225 = vector.multi_reduction <add>, %224, %cst_60 [1] : vector<16x4xf32> to vector<16xf32>
    %226 = vector.shape_cast %225 : vector<16xf32> to vector<16x1xf32>
    %cst_61 = arith.constant 4.000000e+00 : f32
    %227 = vector.broadcast %cst_61 : f32 to vector<16x1xf32>
    %228 = arith.divf %226, %227 : vector<16x1xf32>
    %229 = vector.broadcast %221 : vector<16x1xf32> to vector<16x4xf32>
    %230 = arith.subf %215, %229 : vector<16x4xf32>
    %cst_62 = arith.constant 9.99999974E-6 : f32
    %231 = vector.broadcast %cst_62 : f32 to vector<16x1xf32>
    %232 = arith.addf %228, %231 : vector<16x1xf32>
    %233 = math.rsqrt %232 : vector<16x1xf32>
    %234 = vector.broadcast %233 : vector<16x1xf32> to vector<16x4xf32>
    %235 = arith.mulf %230, %234 : vector<16x4xf32>
    %236 = vector.broadcast %216 : vector<1x4xf32> to vector<16x4xf32>
    %237 = arith.mulf %235, %236 : vector<16x4xf32>
    %238 = vector.broadcast %217 : vector<1x4xf32> to vector<16x4xf32>
    %239 = arith.addf %237, %238 : vector<16x4xf32>
    %240 = vector.extract_strided_slice %186 {offsets = [0, 16], sizes = [4, 16], strides = [1, 1]} : vector<4x32xf32> to vector<4x16xf32>
    %cst_63 = arith.constant dense<0.000000e+00> : vector<16x16xf32>
    %241 = tpu.matmul %239, %240, %cst_63 {dimension_numbers = #tpu.dot_dimension_numbers<[1], [0], [0], [1], [0, 0, 1, 1], [], []>} : vector<16x4xf32>, vector<4x16xf32>, vector<16x16xf32> -> vector<16x16xf32>
    %242 = vector.extract_strided_slice %188 {offsets = [0, 16], sizes = [1, 16], strides = [1, 1]} : vector<1x52xf32> to vector<1x16xf32>
    %243 = vector.broadcast %242 : vector<1x16xf32> to vector<16x16xf32>
    %244 = arith.addf %241, %243 : vector<16x16xf32>
    %cst_64 = arith.constant 0.000000e+00 : f32
    %245 = vector.broadcast %cst_64 : f32 to vector<16x16xf32>
    %246 = arith.maximumf %244, %245 : vector<16x16xf32>
    %cst_65 = arith.constant dense<0.000000e+00> : vector<16x4xf32>
    %247 = tpu.matmul %246, %187, %cst_65 {dimension_numbers = #tpu.dot_dimension_numbers<[1], [0], [0], [1], [0, 0, 1, 1], [], []>} : vector<16x16xf32>, vector<16x4xf32>, vector<16x4xf32> -> vector<16x4xf32>
    %248 = vector.extract_strided_slice %188 {offsets = [0, 32], sizes = [1, 4], strides = [1, 1]} : vector<1x52xf32> to vector<1x4xf32>
    %249 = vector.broadcast %248 : vector<1x4xf32> to vector<16x4xf32>
    %250 = arith.addf %247, %249 : vector<16x4xf32>
    %251 = arith.addf %239, %250 : vector<16x4xf32>
    %252 = vector.extract_strided_slice %188 {offsets = [0, 44], sizes = [1, 4], strides = [1, 1]} : vector<1x52xf32> to vector<1x4xf32>
    %253 = vector.extract_strided_slice %188 {offsets = [0, 48], sizes = [1, 4], strides = [1, 1]} : vector<1x52xf32> to vector<1x4xf32>
    %cst_66 = arith.constant dense<0.000000e+00> : vector<16xf32>
    %254 = vector.multi_reduction <add>, %251, %cst_66 [1] : vector<16x4xf32> to vector<16xf32>
    %255 = vector.shape_cast %254 : vector<16xf32> to vector<16x1xf32>
    %cst_67 = arith.constant 4.000000e+00 : f32
    %256 = vector.broadcast %cst_67 : f32 to vector<16x1xf32>
    %257 = arith.divf %255, %256 : vector<16x1xf32>
    %258 = vector.broadcast %257 : vector<16x1xf32> to vector<16x4xf32>
    %259 = arith.subf %251, %258 : vector<16x4xf32>
    %260 = arith.mulf %259, %259 : vector<16x4xf32>
    %cst_68 = arith.constant dense<0.000000e+00> : vector<16xf32>
    %261 = vector.multi_reduction <add>, %260, %cst_68 [1] : vector<16x4xf32> to vector<16xf32>
    %262 = vector.shape_cast %261 : vector<16xf32> to vector<16x1xf32>
    %cst_69 = arith.constant 4.000000e+00 : f32
    %263 = vector.broadcast %cst_69 : f32 to vector<16x1xf32>
    %264 = arith.divf %262, %263 : vector<16x1xf32>
    %265 = vector.broadcast %257 : vector<16x1xf32> to vector<16x4xf32>
    %266 = arith.subf %251, %265 : vector<16x4xf32>
    %cst_70 = arith.constant 9.99999974E-6 : f32
    %267 = vector.broadcast %cst_70 : f32 to vector<16x1xf32>
    %268 = arith.addf %264, %267 : vector<16x1xf32>
    %269 = math.rsqrt %268 : vector<16x1xf32>
    %270 = vector.broadcast %269 : vector<16x1xf32> to vector<16x4xf32>
    %271 = arith.mulf %266, %270 : vector<16x4xf32>
    %272 = vector.broadcast %252 : vector<1x4xf32> to vector<16x4xf32>
    %273 = arith.mulf %271, %272 : vector<16x4xf32>
    %274 = vector.broadcast %253 : vector<1x4xf32> to vector<16x4xf32>
    %275 = arith.addf %273, %274 : vector<16x4xf32>
    %c120 = arith.constant 120 : index
    %c0_71 = arith.constant 0 : index
    %276 = vector.load %arg1[%c120, %c0_71] : memref<128x56xf32, #tpu.memory_space<vmem>>, vector<8x5xf32>
    %277 = vector.extract_strided_slice %276 {offsets = [0, 0], sizes = [4, 5], strides = [1, 1]} : vector<8x5xf32> to vector<4x5xf32>
    %278 = vector.extract_strided_slice %276 {offsets = [4, 0], sizes = [1, 5], strides = [1, 1]} : vector<8x5xf32> to vector<1x5xf32>
    %279 = vector.extract_strided_slice %276 {offsets = [5, 0], sizes = [1, 5], strides = [1, 1]} : vector<8x5xf32> to vector<1x5xf32>
    %280 = vector.extract_strided_slice %276 {offsets = [6, 0], sizes = [1, 1], strides = [1, 1]} : vector<8x5xf32> to vector<1x1xf32>
    %cst_72 = arith.constant dense<0.000000e+00> : vector<16x5xf32>
    %281 = tpu.matmul %275, %277, %cst_72 {dimension_numbers = #tpu.dot_dimension_numbers<[1], [0], [0], [1], [0, 0, 1, 1], [], []>} : vector<16x4xf32>, vector<4x5xf32>, vector<16x5xf32> -> vector<16x5xf32>
    %282 = vector.broadcast %278 : vector<1x5xf32> to vector<16x5xf32>
    %283 = arith.addf %281, %282 : vector<16x5xf32>
    %cst_73 = arith.constant 0.000000e+00 : f32
    %284 = vector.broadcast %cst_73 : f32 to vector<16x5xf32>
    %285 = arith.cmpf oge, %283, %284 : vector<16x5xf32>
    %cst_74 = arith.constant 0.00999999977 : f32
    %286 = vector.broadcast %cst_74 : f32 to vector<16x5xf32>
    %287 = arith.mulf %286, %283 : vector<16x5xf32>
    %288 = arith.select %285, %283, %287 : vector<16x5xi1>, vector<16x5xf32>
    %cst_75 = arith.constant dense<0.000000e+00> : vector<1x16xf32>
    %289 = tpu.matmul %279, %288, %cst_75 {dimension_numbers = #tpu.dot_dimension_numbers<[1], [1], [0], [0], [0, 0, 1, 0], [], []>} : vector<1x5xf32>, vector<16x5xf32>, vector<1x16xf32> -> vector<1x16xf32>
    %290 = vector.broadcast %280 : vector<1x1xf32> to vector<1x16xf32>
    %291 = arith.addf %289, %290 : vector<1x16xf32>
    %c0_76 = arith.constant 0 : index
    %c0_77 = arith.constant 0 : index
    %292 = vector.load %arg2[%c0_76, %c0_77] : memref<1x16xf32, #tpu.memory_space<vmem>>, vector<1x16xf32>
    tpu.vector_store %arg2[%c0_76, %c0_77], %291 {strides = array<i32>} : memref<1x16xf32, #tpu.memory_space<vmem>>, vector<1x16xf32>,
    return
  }
}

</mosaic_0001>

<llo_original>
// kernel: _forward_jit.1
$region0: #{_forward_jit.1}
  #allocation0 [shape = 'u32[]', space=smem, size = 0x4, offset = 0x4, fixed_abs, tag = 'smem constant byte address 0x4 - core index']
  #allocation1 [shape = 'u32[144,128]{1,0:T(1,128)}', space=vmem, size = 0x12000, scoped, tag = 'internal scratch']
  %s0 = inlined_call_operand.vmem [shape: f32[16,4], index: 0, kind: input, shape index: {}]
  %s1 = inlined_call_operand.vmem [shape: f32[128,56], index: 1, kind: input, shape index: {}]
  %s2 = inlined_call_operand.vmem [shape: f32[1,16], index: 2, kind: output, shape index: {}]
  %s3 = sld [smem:[#allocation0]]
  $region18: #{_forward_jit.1} parent=0
    _
  %s5 = ssub.s32 1, %s3
  %s6 = scalar_select 0, %s5, %s3
  // Predicated region
  $region2: #{_forward_jit.1} parent=0 // pred_check
    _
  $region3: #{_forward_jit.1} parent=0 // pred_check_branch
    %8 = sbr.rel (0) target = $region5
  $region4: #{_forward_jit.1} parent=0 // pred_region
    _
  $region5: #{_forward_jit.1} parent=0 // pred_fallthru
    _
  // Predicated region
  $region6: #{_forward_jit.1} parent=0 // pred_check
    _
  $region7: #{_forward_jit.1} parent=0 // pred_check_branch
    %10 = sbr.rel (0) target = $region9
  $region8: #{_forward_jit.1} parent=0 // pred_region
    _
  $region9: #{_forward_jit.1} parent=0 // pred_fallthru
    _
  %v11 = vld [vmem:[%s1] sm:$0xff]
  %v12 = vld [vmem:[%s1 + $0x8] sm:$0xff]
  %v13 = vld [vmem:[%s1 + $0x10] sm:$0xff]
  %v14 = vld [vmem:[%s1 + $0x18] sm:$0xff]
  %v15 = vld [vmem:[%s1 + $0x20] sm:$0xf]
  %v16 = vld [vmem:[%s0] sm:$0xff]
  %v17 = vld [vmem:[%s0 + $0x8] sm:$0xff]
  %vm18 = vcmask 31744
  %v20 = vsel %vm18, %v16, 0
  %v23 = vsel %vm18, %v17, 0
  %vm25 = vcmask 1043456
  %v27 = vsel %vm25, %v15, 0
  %29 = vmatprep.subr.mxu0 0.0
  %30 = vmatpush1.msra.mxu0 0.0
  %31 = vmatprep.subr.mxu0 0.0
  %32 = vmatpush1.msra.mxu0 0.0
  %33 = vmatprep.subr.mxu0 0.0
  %34 = vmatpush1.msra.mxu0 0.0
  %35 = vmatprep.subr.mxu0 0.0
  %36 = vmatpush1.msra.mxu0 0.0
  %37 = vmatprep.subr.mxu0 0.0
  %38 = vmatpush1.msra.mxu0 0.0
  %39 = vmatprep.subr.mxu0 0.0
  %40 = vmatpush1.msra.mxu0 0.0
  %41 = vmatprep.subr.mxu0 0.0
  %42 = vmatpush1.msra.mxu0 0.0
  %43 = vmatprep.subr.mxu0 0.0
  %44 = vmatpush1.msra.mxu0 0.0
  %45 = vmatprep.subr.mxu0 0.0
  %46 = vmatpush1.msra.mxu0 0.0
  %47 = vmatprep.subr.mxu0 0.0
  %48 = vmatpush1.msra.mxu0 0.0
  %49 = vmatprep.subr.mxu0 0.0
  %50 = vmatpush1.msra.mxu0 0.0
  %51 = vmatprep.subr.mxu0 0.0
  %52 = vmatpush1.msra.mxu0 0.0
  %53 = vmatprep.subr.mxu0 0.0
  %54 = vmatpush1.msra.mxu0 0.0
  %55 = vmatprep.subr.mxu0 0.0
  %56 = vmatpush1.msra.mxu0 0.0
  %57 = vmatprep.subr.mxu0 0.0
  %58 = vmatpush1.msra.mxu0 0.0
  %59 = vmatprep.subr.mxu0 0.0
  %60 = vmatpush1.msra.mxu0 %v27
  %61 = vmatprep.subr.mxu0 0.0
  %62 = vmatpush2.msra.mxu0 0.0
  %63 = vmatprep.subr.mxu0 0.0
  %64 = vmatpush2.msra.mxu0 0.0
  %65 = vmatprep.subr.mxu0 0.0
  %66 = vmatpush2.msra.mxu0 0.0
  %67 = vmatprep.subr.mxu0 0.0
  %68 = vmatpush2.msra.mxu0 0.0
  %69 = vmatprep.subr.mxu0 0.0
  %70 = vmatpush2.msra.mxu0 0.0
  %71 = vmatprep.subr.mxu0 0.0
  %72 = vmatpush2.msra.mxu0 0.0
  %73 = vmatprep.subr.mxu0 0.0
  %74 = vmatpush2.msra.mxu0 0.0
  %75 = vmatprep.subr.mxu0 0.0
  %76 = vmatpush2.msra.mxu0 0.0
  %77 = vmatprep.subr.mxu0 0.0
  %78 = vmatpush2.msra.mxu0 0.0
  %79 = vmatprep.subr.mxu0 0.0
  %80 = vmatpush2.msra.mxu0 0.0
  %81 = vmatprep.subr.mxu0 0.0
  %82 = vmatpush2.msra.mxu0 0.0
  %83 = vmatprep.subr.mxu0 0.0
  %84 = vmatpush2.msra.mxu0 0.0
  %85 = vmatprep.subr.mxu0 0.0
  %86 = vmatpush2.msra.mxu0 0.0
  %87 = vmatprep.subr.mxu0 0.0
  %88 = vmatpush2.msra.mxu0 0.0
  %89 = vmatprep.subr.mxu0 0.0
  %90 = vmatpush2.msra.mxu0 0.0
  %91 = vmatprep.subr.mxu0 0.0
  %92 = vmatpush2.msra.mxu0 0.0
  %93 = vmatprep.mubr.f32.mxu0 0.0
  %94 = vmatmul.mubr.f32.gmra.mxu0 %v20
  %v95 = vpop.f32.mrf.mxu0
  %v96 = vadd.f32 %v13, %v95
  %v97 = vpop.f32.mrf.mxu0
  %98 = vmatprep.mubr.f32.mxu0 0.0
  %99 = vmatmul.mubr.f32.gmra.mxu0 %v23
  %v100 = vpop.f32.mrf.mxu0
  %v101 = vadd.f32 %v14, %v100
  %v102 = vpop.f32.mrf.mxu0
  %103 = vdwg.mxu0
  %v104 = vld [vmem:[%s1 + $0x28] sm:$0xf]
  %v105 = vld [vmem:[%s1 + $0x40] sm:$0xff]
  %v106 = vld [vmem:[%s1 + $0x48] sm:$0xff]
  %v107 = vld [vmem:[%s1 + $0x70] sm:$0x1]
  %v108 = vlaneseq
  %v109 = vshrl.u32 %v108, 7
  %v110 = vsub.s32 0, %v109
  %v111 = vrot.slane %v107, %v110
  %v113 = vsel %vm18, %v96, 0
  %v116 = vsel %vm18, %v101, 0
  %v119 = vsel %vm25, %v104, 0
  %121 = vmatprep.subr.mxu0 0.0
  %122 = vmatpush1.msra.mxu0 0.0
  %123 = vmatprep.subr.mxu0 0.0
  %124 = vmatpush1.msra.mxu0 0.0
  %125 = vmatprep.subr.mxu0 0.0
  %126 = vmatpush1.msra.mxu0 0.0
  %127 = vmatprep.subr.mxu0 0.0
  %128 = vmatpush1.msra.mxu0 0.0
  %129 = vmatprep.subr.mxu0 0.0
  %130 = vmatpush1.msra.mxu0 0.0
  %131 = vmatprep.subr.mxu0 0.0
  %132 = vmatpush1.msra.mxu0 0.0
  %133 = vmatprep.subr.mxu0 0.0
  %134 = vmatpush1.msra.mxu0 0.0
  %135 = vmatprep.subr.mxu0 0.0
  %136 = vmatpush1.msra.mxu0 0.0
  %137 = vmatprep.subr.mxu0 0.0
  %138 = vmatpush1.msra.mxu0 0.0
  %139 = vmatprep.subr.mxu0 0.0
  %140 = vmatpush1.msra.mxu0 0.0
  %141 = vmatprep.subr.mxu0 0.0
  %142 = vmatpush1.msra.mxu0 0.0
  %143 = vmatprep.subr.mxu0 0.0
  %144 = vmatpush1.msra.mxu0 0.0
  %145 = vmatprep.subr.mxu0 0.0
  %146 = vmatpush1.msra.mxu0 0.0
  %147 = vmatprep.subr.mxu0 0.0
  %148 = vmatpush1.msra.mxu0 0.0
  %149 = vmatprep.subr.mxu0 0.0
  %150 = vmatpush1.msra.mxu0 0.0
  %151 = vmatprep.subr.mxu0 0.0
  %152 = vmatpush1.msra.mxu0 %v119
  %153 = vmatprep.subr.mxu0 0.0
  %154 = vmatpush2.msra.mxu0 0.0
  %155 = vmatprep.subr.mxu0 0.0
  %156 = vmatpush2.msra.mxu0 0.0
  %157 = vmatprep.subr.mxu0 0.0
  %158 = vmatpush2.msra.mxu0 0.0
  %159 = vmatprep.subr.mxu0 0.0
  %160 = vmatpush2.msra.mxu0 0.0
  %161 = vmatprep.subr.mxu0 0.0
  %162 = vmatpush2.msra.mxu0 0.0
  %163 = vmatprep.subr.mxu0 0.0
  %164 = vmatpush2.msra.mxu0 0.0
  %165 = vmatprep.subr.mxu0 0.0
  %166 = vmatpush2.msra.mxu0 0.0
  %167 = vmatprep.subr.mxu0 0.0
  %168 = vmatpush2.msra.mxu0 0.0
  %169 = vmatprep.subr.mxu0 0.0
  %170 = vmatpush2.msra.mxu0 0.0
  %171 = vmatprep.subr.mxu0 0.0
  %172 = vmatpush2.msra.mxu0 0.0
  %173 = vmatprep.subr.mxu0 0.0
  %174 = vmatpush2.msra.mxu0 0.0
  %175 = vmatprep.subr.mxu0 0.0
  %176 = vmatpush2.msra.mxu0 0.0
  %177 = vmatprep.subr.mxu0 0.0
  %178 = vmatpush2.msra.mxu0 0.0
  %179 = vmatprep.subr.mxu0 0.0
  %180 = vmatpush2.msra.mxu0 0.0
  %181 = vmatprep.subr.mxu0 0.0
  %182 = vmatpush2.msra.mxu0 0.0
  %183 = vmatprep.subr.mxu0 0.0
  %184 = vmatpush2.msra.mxu0 0.0
  %185 = vmatprep.mubr.f32.mxu0 0.0
  %186 = vmatmul.mubr.f32.gmra.mxu0 %v113
  %v187 = vpop.f32.mrf.mxu0
  %v188 = vadd.f32 %v111, %v187
  %v189 = vpop.f32.mrf.mxu0
  %190 = vmatprep.mubr.f32.mxu0 0.0
  %191 = vmatmul.mubr.f32.gmra.mxu0 %v116
  %v192 = vpop.f32.mrf.mxu0
  %v193 = vadd.f32 %v111, %v192
  %v194 = vpop.f32.mrf.mxu0
  %195 = vdwg.mxu0
  %198 = vrot.lane.b32.xlu0 %v188, 124
  %v199 = vpop.permute.xlu0 %198
  %200 = vrot.lane.b32.xlu0 %v193, 124
  %v201 = vpop.permute.xlu0 %200
  %v202 = vsel %vm18, %v188, 0
  %v204 = vsel %vm18, %v193, 0
  %v206 = vsel %vm18, %v199, 0
  %v208 = vsel %vm18, %v201, 0
  %210 = vmatprep.subr.mxu0 0.0
  %211 = vmatpush1.xpose.msra.mxu0 0.0
  %212 = vmatprep.subr.mxu0 0.0
  %213 = vmatpush1.xpose.msra.mxu0 0.0
  %214 = vmatprep.subr.mxu0 0.0
  %215 = vmatpush1.xpose.msra.mxu0 0.0
  %216 = vmatprep.subr.mxu0 0.0
  %217 = vmatpush1.xpose.msra.mxu0 0.0
  %218 = vmatprep.subr.mxu0 0.0
  %219 = vmatpush1.xpose.msra.mxu0 0.0
  %220 = vmatprep.subr.mxu0 0.0
  %221 = vmatpush1.xpose.msra.mxu0 0.0
  %222 = vmatprep.subr.mxu0 0.0
  %223 = vmatpush1.xpose.msra.mxu0 0.0
  %224 = vmatprep.subr.mxu0 0.0
  %225 = vmatpush1.xpose.msra.mxu0 0.0
  %226 = vmatprep.subr.mxu0 0.0
  %227 = vmatpush1.xpose.msra.mxu0 0.0
  %228 = vmatprep.subr.mxu0 0.0
  %229 = vmatpush1.xpose.msra.mxu0 0.0
  %230 = vmatprep.subr.mxu0 0.0
  %231 = vmatpush1.xpose.msra.mxu0 0.0
  %232 = vmatprep.subr.mxu0 0.0
  %233 = vmatpush1.xpose.msra.mxu0 0.0
  %234 = vmatprep.subr.mxu0 0.0
  %235 = vmatpush1.xpose.msra.mxu0 0.0
  %236 = vmatprep.subr.mxu0 0.0
  %237 = vmatpush1.xpose.msra.mxu0 0.0
  %238 = vmatprep.subr.mxu0 0.0
  %239 = vmatpush1.xpose.msra.mxu0 %v208
  %240 = vmatprep.subr.mxu0 0.0
  %241 = vmatpush1.xpose.msra.mxu0 %v206
  %242 = vmatprep.subr.mxu0 0.0
  %243 = vmatpush2.xpose.msra.mxu0 0.0
  %244 = vmatprep.subr.mxu0 0.0
  %245 = vmatpush2.xpose.msra.mxu0 0.0
  %246 = vmatprep.subr.mxu0 0.0
  %247 = vmatpush2.xpose.msra.mxu0 0.0
  %248 = vmatprep.subr.mxu0 0.0
  %249 = vmatpush2.xpose.msra.mxu0 0.0
  %250 = vmatprep.subr.mxu0 0.0
  %251 = vmatpush2.xpose.msra.mxu0 0.0
  %252 = vmatprep.subr.mxu0 0.0
  %253 = vmatpush2.xpose.msra.mxu0 0.0
  %254 = vmatprep.subr.mxu0 0.0
  %255 = vmatpush2.xpose.msra.mxu0 0.0
  %256 = vmatprep.subr.mxu0 0.0
  %257 = vmatpush2.xpose.msra.mxu0 0.0
  %258 = vmatprep.subr.mxu0 0.0
  %259 = vmatpush2.xpose.msra.mxu0 0.0
  %260 = vmatprep.subr.mxu0 0.0
  %261 = vmatpush2.xpose.msra.mxu0 0.0
  %262 = vmatprep.subr.mxu0 0.0
  %263 = vmatpush2.xpose.msra.mxu0 0.0
  %264 = vmatprep.subr.mxu0 0.0
  %265 = vmatpush2.xpose.msra.mxu0 0.0
  %266 = vmatprep.subr.mxu0 0.0
  %267 = vmatpush2.xpose.msra.mxu0 0.0
  %268 = vmatprep.subr.mxu0 0.0
  %269 = vmatpush2.xpose.msra.mxu0 0.0
  %270 = vmatprep.subr.mxu0 0.0
  %271 = vmatpush2.xpose.msra.mxu0 0.0
  %272 = vmatprep.subr.mxu0 0.0
  %273 = vmatpush2.xpose.msra.mxu0 0.0
  %274 = vmatprep.mubr.f32.mxu0 0.0
  %275 = vmatmul.mubr.f32.gmra.mxu0 %v202
  %v276 = vpop.f32.mrf.mxu0
  %v277 = vadd.f32 %v11, %v276
  %v278 = vpop.f32.mrf.mxu0
  %279 = vmatprep.mubr.f32.mxu0 0.0
  %280 = vmatmul.mubr.f32.gmra.mxu0 %v204
  %v281 = vpop.f32.mrf.mxu0
  %v282 = vadd.f32 %v12, %v281
  %v283 = vpop.f32.mrf.mxu0
  %284 = vdwg.mxu0
  %vm285 = vcmask 130048
  %v286 = vsel %vm285, %v277, -inf
  %287 = vmax.xlane.f32.xlu0 %v286
  %v288 = vpop.xlane.xlu0 %287
  %v289 = vsel %vm285, %v282, -inf
  %290 = vmax.xlane.f32.xlu0 %v289
  %v291 = vpop.xlane.xlu0 %290
  %v292 = vsub.f32 %v277, %v288
  %v293 = vsub.f32 %v282, %v291
  %v294 = vmul.f32 %v292, 1.442695
  %v295 = vpow.pop %v294
  %v296 = vmul.f32 %v293, 1.442695
  %v297 = vpow.pop %v296
  %v298 = vsel %vm285, %v295, 0.0
  %299 = vadd.xlane.f32.xlu0 %v298
  %v300 = vpop.xlane.xlu0 %299
  %v301 = vsel %vm285, %v297, 0.0
  %302 = vadd.xlane.f32.xlu0 %v301
  %v303 = vpop.xlane.xlu0 %302
  %v304 = vrcp.pop %v300
  %v305 = vrcp.pop %v303
  %v306 = vmul.f32 %v295, %v304
  %v307 = vmul.f32 %v297, %v305
  %308 = vrot.lane.b32.xlu0 %v188, 120
  %v309 = vpop.permute.xlu0 %308
  %310 = vrot.lane.b32.xlu0 %v193, 120
  %v311 = vpop.permute.xlu0 %310
  %v315 = vsel %vm285, %v306, 0
  %v318 = vsel %vm285, %v307, 0
  %320 = vmatprep.subr.mxu0 0.0
  %321 = vmatpush1.msra.mxu0 0.0
  %322 = vmatprep.subr.mxu0 0.0
  %323 = vmatpush1.msra.mxu0 0.0
  %324 = vmatprep.subr.mxu0 0.0
  %325 = vmatpush1.msra.mxu0 0.0
  %326 = vmatprep.subr.mxu0 0.0
  %327 = vmatpush1.msra.mxu0 0.0
  %328 = vmatprep.subr.mxu0 0.0
  %329 = vmatpush1.msra.mxu0 0.0
  %330 = vmatprep.subr.mxu0 0.0
  %331 = vmatpush1.msra.mxu0 0.0
  %332 = vmatprep.subr.mxu0 0.0
  %333 = vmatpush1.msra.mxu0 0.0
  %334 = vmatprep.subr.mxu0 0.0
  %335 = vmatpush1.msra.mxu0 0.0
  %336 = vmatprep.subr.mxu0 0.0
  %337 = vmatpush1.msra.mxu0 0.0
  %338 = vmatprep.subr.mxu0 0.0
  %339 = vmatpush1.msra.mxu0 0.0
  %340 = vmatprep.subr.mxu0 0.0
  %341 = vmatpush1.msra.mxu0 0.0
  %342 = vmatprep.subr.mxu0 0.0
  %343 = vmatpush1.msra.mxu0 0.0
  %344 = vmatprep.subr.mxu0 0.0
  %345 = vmatpush1.msra.mxu0 0.0
  %346 = vmatprep.subr.mxu0 0.0
  %347 = vmatpush1.msra.mxu0 0.0
  %348 = vmatprep.subr.mxu0 0.0
  %349 = vmatpush1.msra.mxu0 %v311
  %350 = vmatprep.subr.mxu0 0.0
  %351 = vmatpush1.msra.mxu0 %v309
  %352 = vmatprep.subr.mxu0 0.0
  %353 = vmatpush2.msra.mxu0 0.0
  %354 = vmatprep.subr.mxu0 0.0
  %355 = vmatpush2.msra.mxu0 0.0
  %356 = vmatprep.subr.mxu0 0.0
  %357 = vmatpush2.msra.mxu0 0.0
  %358 = vmatprep.subr.mxu0 0.0
  %359 = vmatpush2.msra.mxu0 0.0
  %360 = vmatprep.subr.mxu0 0.0
  %361 = vmatpush2.msra.mxu0 0.0
  %362 = vmatprep.subr.mxu0 0.0
  %363 = vmatpush2.msra.mxu0 0.0
  %364 = vmatprep.subr.mxu0 0.0
  %365 = vmatpush2.msra.mxu0 0.0
  %366 = vmatprep.subr.mxu0 0.0
  %367 = vmatpush2.msra.mxu0 0.0
  %368 = vmatprep.subr.mxu0 0.0
  %369 = vmatpush2.msra.mxu0 0.0
  %370 = vmatprep.subr.mxu0 0.0
  %371 = vmatpush2.msra.mxu0 0.0
  %372 = vmatprep.subr.mxu0 0.0
  %373 = vmatpush2.msra.mxu0 0.0
  %374 = vmatprep.subr.mxu0 0.0
  %375 = vmatpush2.msra.mxu0 0.0
  %376 = vmatprep.subr.mxu0 0.0
  %377 = vmatpush2.msra.mxu0 0.0
  %378 = vmatprep.subr.mxu0 0.0
  %379 = vmatpush2.msra.mxu0 0.0
  %380 = vmatprep.subr.mxu0 0.0
  %381 = vmatpush2.msra.mxu0 0.0
  %382 = vmatprep.subr.mxu0 0.0
  %383 = vmatpush2.msra.mxu0 0.0
  %384 = vmatprep.mubr.f32.mxu0 0.0
  %385 = vmatmul.mubr.f32.gmra.mxu0 %v315
  %v386 = vpop.f32.mrf.mxu0
  %v387 = vadd.f32 0.0, %v386
  %v388 = vpop.f32.mrf.mxu0
  %389 = vmatprep.mubr.f32.mxu0 0.0
  %390 = vmatmul.mubr.f32.gmra.mxu0 %v318
  %v391 = vpop.f32.mrf.mxu0
  %v392 = vadd.f32 0.0, %v391
  %v393 = vpop.f32.mrf.mxu0
  %394 = vdwg.mxu0
  %395 = vrot.lane.b32.xlu0 %v104, 116
  %v396 = vpop.permute.xlu0 %395
  %398 = vrot.lane.b32.xlu0 %v111, 116
  %v399 = vpop.permute.xlu0 %398
  %v402 = vsel %vm18, %v387, 0
  %v405 = vsel %vm18, %v392, 0
  %v407 = vsel %vm25, %v396, 0
  %409 = vmatprep.subr.mxu0 0.0
  %410 = vmatpush1.msra.mxu0 0.0
  %411 = vmatprep.subr.mxu0 0.0
  %412 = vmatpush1.msra.mxu0 0.0
  %413 = vmatprep.subr.mxu0 0.0
  %414 = vmatpush1.msra.mxu0 0.0
  %415 = vmatprep.subr.mxu0 0.0
  %416 = vmatpush1.msra.mxu0 0.0
  %417 = vmatprep.subr.mxu0 0.0
  %418 = vmatpush1.msra.mxu0 0.0
  %419 = vmatprep.subr.mxu0 0.0
  %420 = vmatpush1.msra.mxu0 0.0
  %421 = vmatprep.subr.mxu0 0.0
  %422 = vmatpush1.msra.mxu0 0.0
  %423 = vmatprep.subr.mxu0 0.0
  %424 = vmatpush1.msra.mxu0 0.0
  %425 = vmatprep.subr.mxu0 0.0
  %426 = vmatpush1.msra.mxu0 0.0
  %427 = vmatprep.subr.mxu0 0.0
  %428 = vmatpush1.msra.mxu0 0.0
  %429 = vmatprep.subr.mxu0 0.0
  %430 = vmatpush1.msra.mxu0 0.0
  %431 = vmatprep.subr.mxu0 0.0
  %432 = vmatpush1.msra.mxu0 0.0
  %433 = vmatprep.subr.mxu0 0.0
  %434 = vmatpush1.msra.mxu0 0.0
  %435 = vmatprep.subr.mxu0 0.0
  %436 = vmatpush1.msra.mxu0 0.0
  %437 = vmatprep.subr.mxu0 0.0
  %438 = vmatpush1.msra.mxu0 0.0
  %439 = vmatprep.subr.mxu0 0.0
  %440 = vmatpush1.msra.mxu0 %v407
  %441 = vmatprep.subr.mxu0 0.0
  %442 = vmatpush2.msra.mxu0 0.0
  %443 = vmatprep.subr.mxu0 0.0
  %444 = vmatpush2.msra.mxu0 0.0
  %445 = vmatprep.subr.mxu0 0.0
  %446 = vmatpush2.msra.mxu0 0.0
  %447 = vmatprep.subr.mxu0 0.0
  %448 = vmatpush2.msra.mxu0 0.0
  %449 = vmatprep.subr.mxu0 0.0
  %450 = vmatpush2.msra.mxu0 0.0
  %451 = vmatprep.subr.mxu0 0.0
  %452 = vmatpush2.msra.mxu0 0.0
  %453 = vmatprep.subr.mxu0 0.0
  %454 = vmatpush2.msra.mxu0 0.0
  %455 = vmatprep.subr.mxu0 0.0
  %456 = vmatpush2.msra.mxu0 0.0
  %457 = vmatprep.subr.mxu0 0.0
  %458 = vmatpush2.msra.mxu0 0.0
  %459 = vmatprep.subr.mxu0 0.0
  %460 = vmatpush2.msra.mxu0 0.0
  %461 = vmatprep.subr.mxu0 0.0
  %462 = vmatpush2.msra.mxu0 0.0
  %463 = vmatprep.subr.mxu0 0.0
  %464 = vmatpush2.msra.mxu0 0.0
  %465 = vmatprep.subr.mxu0 0.0
  %466 = vmatpush2.msra.mxu0 0.0
  %467 = vmatprep.subr.mxu0 0.0
  %468 = vmatpush2.msra.mxu0 0.0
  %469 = vmatprep.subr.mxu0 0.0
  %470 = vmatpush2.msra.mxu0 0.0
  %471 = vmatprep.subr.mxu0 0.0
  %472 = vmatpush2.msra.mxu0 0.0
  %473 = vmatprep.mubr.f32.mxu0 0.0
  %474 = vmatmul.mubr.f32.gmra.mxu0 %v402
  %v475 = vpop.f32.mrf.mxu0
  %v476 = vadd.f32 %v399, %v475
  %v477 = vpop.f32.mrf.mxu0
  %478 = vmatprep.mubr.f32.mxu0 0.0
  %479 = vmatmul.mubr.f32.gmra.mxu0 %v405
  %v480 = vpop.f32.mrf.mxu0
  %v481 = vadd.f32 %v399, %v480
  %v482 = vpop.f32.mrf.mxu0
  %483 = vdwg.mxu0
  %v484 = vadd.f32 %v96, %v476
  %v485 = vadd.f32 %v101, %v481
  %v486 = vsel %vm18, %v484, 0.0
  %487 = vadd.xlane.f32.xlu0 %v486
  %v488 = vpop.xlane.xlu0 %487
  %v489 = vsel %vm18, %v485, 0.0
  %490 = vadd.xlane.f32.xlu0 %v489
  %v491 = vpop.xlane.xlu0 %490
  %v492 = vrcp.pop 4.0
  %v493 = vmul.f32 %v488, %v492
  %v494 = vmul.f32 %v491, %v492
  %v495 = vsub.f32 %v484, %v493
  %v496 = vsub.f32 %v485, %v494
  %v497 = vmul.f32 %v495, %v495
  %v498 = vmul.f32 %v496, %v496
  %v499 = vsel %vm18, %v497, 0.0
  %500 = vadd.xlane.f32.xlu0 %v499
  %v501 = vpop.xlane.xlu0 %500
  %v502 = vsel %vm18, %v498, 0.0
  %503 = vadd.xlane.f32.xlu0 %v502
  %v504 = vpop.xlane.xlu0 %503
  %v505 = vmul.f32 %v501, %v492
  %v506 = vmul.f32 %v504, %v492
  %v507 = vadd.f32 %v505, 1e-05
  %v508 = vadd.f32 %v506, 1e-05
  %v509 = vrsqrt.pop %v507
  %v510 = vrsqrt.pop %v508
  %v511 = vmul.f32 %v495, %v509
  %v512 = vmul.f32 %v496, %v510
  %513 = vrot.lane.b32.xlu0 %v111, 92
  %v514 = vpop.permute.xlu0 %513
  %v516 = vmul.f32 %v511, %v514
  %v517 = vmul.f32 %v512, %v514
  %518 = vrot.lane.b32.xlu0 %v111, 88
  %v519 = vpop.permute.xlu0 %518
  %v521 = vadd.f32 %v516, %v519
  %v522 = vadd.f32 %v517, %v519
  %523 = vrot.lane.b32.xlu0 %v104, 112
  %v524 = vpop.permute.xlu0 %523
  %525 = vrot.lane.b32.xlu0 %v111, 112
  %v526 = vpop.permute.xlu0 %525
  %v529 = vsel %vm18, %v521, 0
  %v532 = vsel %vm18, %v522, 0
  %v534 = vsel %vm25, %v524, 0
  %536 = vmatprep.subr.mxu0 0.0
  %537 = vmatpush1.msra.mxu0 0.0
  %538 = vmatprep.subr.mxu0 0.0
  %539 = vmatpush1.msra.mxu0 0.0
  %540 = vmatprep.subr.mxu0 0.0
  %541 = vmatpush1.msra.mxu0 0.0
  %542 = vmatprep.subr.mxu0 0.0
  %543 = vmatpush1.msra.mxu0 0.0
  %544 = vmatprep.subr.mxu0 0.0
  %545 = vmatpush1.msra.mxu0 0.0
  %546 = vmatprep.subr.mxu0 0.0
  %547 = vmatpush1.msra.mxu0 0.0
  %548 = vmatprep.subr.mxu0 0.0
  %549 = vmatpush1.msra.mxu0 0.0
  %550 = vmatprep.subr.mxu0 0.0
  %551 = vmatpush1.msra.mxu0 0.0
  %552 = vmatprep.subr.mxu0 0.0
  %553 = vmatpush1.msra.mxu0 0.0
  %554 = vmatprep.subr.mxu0 0.0
  %555 = vmatpush1.msra.mxu0 0.0
  %556 = vmatprep.subr.mxu0 0.0
  %557 = vmatpush1.msra.mxu0 0.0
  %558 = vmatprep.subr.mxu0 0.0
  %559 = vmatpush1.msra.mxu0 0.0
  %560 = vmatprep.subr.mxu0 0.0
  %561 = vmatpush1.msra.mxu0 0.0
  %562 = vmatprep.subr.mxu0 0.0
  %563 = vmatpush1.msra.mxu0 0.0
  %564 = vmatprep.subr.mxu0 0.0
  %565 = vmatpush1.msra.mxu0 0.0
  %566 = vmatprep.subr.mxu0 0.0
  %567 = vmatpush1.msra.mxu0 %v534
  %568 = vmatprep.subr.mxu0 0.0
  %569 = vmatpush2.msra.mxu0 0.0
  %570 = vmatprep.subr.mxu0 0.0
  %571 = vmatpush2.msra.mxu0 0.0
  %572 = vmatprep.subr.mxu0 0.0
  %573 = vmatpush2.msra.mxu0 0.0
  %574 = vmatprep.subr.mxu0 0.0
  %575 = vmatpush2.msra.mxu0 0.0
  %576 = vmatprep.subr.mxu0 0.0
  %577 = vmatpush2.msra.mxu0 0.0
  %578 = vmatprep.subr.mxu0 0.0
  %579 = vmatpush2.msra.mxu0 0.0
  %580 = vmatprep.subr.mxu0 0.0
  %581 = vmatpush2.msra.mxu0 0.0
  %582 = vmatprep.subr.mxu0 0.0
  %583 = vmatpush2.msra.mxu0 0.0
  %584 = vmatprep.subr.mxu0 0.0
  %585 = vmatpush2.msra.mxu0 0.0
  %586 = vmatprep.subr.mxu0 0.0
  %587 = vmatpush2.msra.mxu0 0.0
  %588 = vmatprep.subr.mxu0 0.0
  %589 = vmatpush2.msra.mxu0 0.0
  %590 = vmatprep.subr.mxu0 0.0
  %591 = vmatpush2.msra.mxu0 0.0
  %592 = vmatprep.subr.mxu0 0.0
  %593 = vmatpush2.msra.mxu0 0.0
  %594 = vmatprep.subr.mxu0 0.0
  %595 = vmatpush2.msra.mxu0 0.0
  %596 = vmatprep.subr.mxu0 0.0
  %597 = vmatpush2.msra.mxu0 0.0
  %598 = vmatprep.subr.mxu0 0.0
  %599 = vmatpush2.msra.mxu0 0.0
  %600 = vmatprep.mubr.f32.mxu0 0.0
  %601 = vmatmul.mubr.f32.gmra.mxu0 %v529
  %v602 = vpop.f32.mrf.mxu0
  %v603 = vadd.f32 %v526, %v602
  %v604 = vpop.f32.mrf.mxu0
  %605 = vmatprep.mubr.f32.mxu0 0.0
  %606 = vmatmul.mubr.f32.gmra.mxu0 %v532
  %v607 = vpop.f32.mrf.mxu0
  %v608 = vadd.f32 %v526, %v607
  %v609 = vpop.f32.mrf.mxu0
  %610 = vdwg.mxu0
  %v611 = vmax.f32 %v603, 0.0
  %v612 = vmax.f32 %v608, 0.0
  %613 = vrot.lane.b32.xlu0 %v111, 96
  %v614 = vpop.permute.xlu0 %613
  %v617 = vsel %vm285, %v611, 0
  %v620 = vsel %vm285, %v612, 0
  %622 = vmatprep.subr.mxu0 0.0
  %623 = vmatpush1.msra.mxu0 0.0
  %624 = vmatprep.subr.mxu0 0.0
  %625 = vmatpush1.msra.mxu0 0.0
  %626 = vmatprep.subr.mxu0 0.0
  %627 = vmatpush1.msra.mxu0 0.0
  %628 = vmatprep.subr.mxu0 0.0
  %629 = vmatpush1.msra.mxu0 0.0
  %630 = vmatprep.subr.mxu0 0.0
  %631 = vmatpush1.msra.mxu0 0.0
  %632 = vmatprep.subr.mxu0 0.0
  %633 = vmatpush1.msra.mxu0 0.0
  %634 = vmatprep.subr.mxu0 0.0
  %635 = vmatpush1.msra.mxu0 0.0
  %636 = vmatprep.subr.mxu0 0.0
  %637 = vmatpush1.msra.mxu0 0.0
  %638 = vmatprep.subr.mxu0 0.0
  %639 = vmatpush1.msra.mxu0 0.0
  %640 = vmatprep.subr.mxu0 0.0
  %641 = vmatpush1.msra.mxu0 0.0
  %642 = vmatprep.subr.mxu0 0.0
  %643 = vmatpush1.msra.mxu0 0.0
  %644 = vmatprep.subr.mxu0 0.0
  %645 = vmatpush1.msra.mxu0 0.0
  %646 = vmatprep.subr.mxu0 0.0
  %647 = vmatpush1.msra.mxu0 0.0
  %648 = vmatprep.subr.mxu0 0.0
  %649 = vmatpush1.msra.mxu0 0.0
  %650 = vmatprep.subr.mxu0 0.0
  %651 = vmatpush1.msra.mxu0 %v106
  %652 = vmatprep.subr.mxu0 0.0
  %653 = vmatpush1.msra.mxu0 %v105
  %654 = vmatprep.subr.mxu0 0.0
  %655 = vmatpush2.msra.mxu0 0.0
  %656 = vmatprep.subr.mxu0 0.0
  %657 = vmatpush2.msra.mxu0 0.0
  %658 = vmatprep.subr.mxu0 0.0
  %659 = vmatpush2.msra.mxu0 0.0
  %660 = vmatprep.subr.mxu0 0.0
  %661 = vmatpush2.msra.mxu0 0.0
  %662 = vmatprep.subr.mxu0 0.0
  %663 = vmatpush2.msra.mxu0 0.0
  %664 = vmatprep.subr.mxu0 0.0
  %665 = vmatpush2.msra.mxu0 0.0
  %666 = vmatprep.subr.mxu0 0.0
  %667 = vmatpush2.msra.mxu0 0.0
  %668 = vmatprep.subr.mxu0 0.0
  %669 = vmatpush2.msra.mxu0 0.0
  %670 = vmatprep.subr.mxu0 0.0
  %671 = vmatpush2.msra.mxu0 0.0
  %672 = vmatprep.subr.mxu0 0.0
  %673 = vmatpush2.msra.mxu0 0.0
  %674 = vmatprep.subr.mxu0 0.0
  %675 = vmatpush2.msra.mxu0 0.0
  %676 = vmatprep.subr.mxu0 0.0
  %677 = vmatpush2.msra.mxu0 0.0
  %678 = vmatprep.subr.mxu0 0.0
  %679 = vmatpush2.msra.mxu0 0.0
  %680 = vmatprep.subr.mxu0 0.0
  %681 = vmatpush2.msra.mxu0 0.0
  %682 = vmatprep.subr.mxu0 0.0
  %683 = vmatpush2.msra.mxu0 0.0
  %684 = vmatprep.subr.mxu0 0.0
  %685 = vmatpush2.msra.mxu0 0.0
  %686 = vmatprep.mubr.f32.mxu0 0.0
  %687 = vmatmul.mubr.f32.gmra.mxu0 %v617
  %v688 = vpop.f32.mrf.mxu0
  %v689 = vadd.f32 %v614, %v688
  %v690 = vpop.f32.mrf.mxu0
  %691 = vmatprep.mubr.f32.mxu0 0.0
  %692 = vmatmul.mubr.f32.gmra.mxu0 %v620
  %v693 = vpop.f32.mrf.mxu0
  %v694 = vadd.f32 %v614, %v693
  %v695 = vpop.f32.mrf.mxu0
  %696 = vdwg.mxu0
  %v697 = vadd.f32 %v521, %v689
  %v698 = vadd.f32 %v522, %v694
  %v699 = vsel %vm18, %v697, 0.0
  %700 = vadd.xlane.f32.xlu0 %v699
  %v701 = vpop.xlane.xlu0 %700
  %v702 = vsel %vm18, %v698, 0.0
  %703 = vadd.xlane.f32.xlu0 %v702
  %v704 = vpop.xlane.xlu0 %703
  %v705 = vmul.f32 %v701, %v492
  %v706 = vmul.f32 %v704, %v492
  %v707 = vsub.f32 %v697, %v705
  %v708 = vsub.f32 %v698, %v706
  %v709 = vmul.f32 %v707, %v707
  %v710 = vmul.f32 %v708, %v708
  %v711 = vsel %vm18, %v709, 0.0
  %712 = vadd.xlane.f32.xlu0 %v711
  %v713 = vpop.xlane.xlu0 %712
  %v714 = vsel %vm18, %v710, 0.0
  %715 = vadd.xlane.f32.xlu0 %v714
  %v716 = vpop.xlane.xlu0 %715
  %v717 = vmul.f32 %v713, %v492
  %v718 = vmul.f32 %v716, %v492
  %v719 = vadd.f32 %v717, 1e-05
  %v720 = vadd.f32 %v718, 1e-05
  %v721 = vrsqrt.pop %v719
  %v722 = vrsqrt.pop %v720
  %v723 = vmul.f32 %v707, %v721
  %v724 = vmul.f32 %v708, %v722
  %725 = vrot.lane.b32.xlu0 %v111, 84
  %v726 = vpop.permute.xlu0 %725
  %v728 = vmul.f32 %v723, %v726
  %v729 = vmul.f32 %v724, %v726
  %730 = vrot.lane.b32.xlu0 %v111, 80
  %v731 = vpop.permute.xlu0 %730
  %v733 = vadd.f32 %v728, %v731
  %v734 = vadd.f32 %v729, %v731
  %v735 = vld [vmem:[%s1 + $0x30] sm:$0xf]
  %v736 = vld [vmem:[%s1 + $0x50] sm:$0xff]
  %v737 = vld [vmem:[%s1 + $0x58] sm:$0xff]
  %v738 = vld [vmem:[%s1 + $0x71] sm:$0x1]
  %v739 = vlaneseq
  %v740 = vshrl.u32 %v739, 7
  %v741 = vsub.s32 0, %v740
  %v742 = vrot.slane %v738, %v741
  %v744 = vsel %vm18, %v733, 0
  %v747 = vsel %vm18, %v734, 0
  %v750 = vsel %vm25, %v735, 0
  %752 = vmatprep.subr.mxu0 0.0
  %753 = vmatpush1.msra.mxu0 0.0
  %754 = vmatprep.subr.mxu0 0.0
  %755 = vmatpush1.msra.mxu0 0.0
  %756 = vmatprep.subr.mxu0 0.0
  %757 = vmatpush1.msra.mxu0 0.0
  %758 = vmatprep.subr.mxu0 0.0
  %759 = vmatpush1.msra.mxu0 0.0
  %760 = vmatprep.subr.mxu0 0.0
  %761 = vmatpush1.msra.mxu0 0.0
  %762 = vmatprep.subr.mxu0 0.0
  %763 = vmatpush1.msra.mxu0 0.0
  %764 = vmatprep.subr.mxu0 0.0
  %765 = vmatpush1.msra.mxu0 0.0
  %766 = vmatprep.subr.mxu0 0.0
  %767 = vmatpush1.msra.mxu0 0.0
  %768 = vmatprep.subr.mxu0 0.0
  %769 = vmatpush1.msra.mxu0 0.0
  %770 = vmatprep.subr.mxu0 0.0
  %771 = vmatpush1.msra.mxu0 0.0
  %772 = vmatprep.subr.mxu0 0.0
  %773 = vmatpush1.msra.mxu0 0.0
  %774 = vmatprep.subr.mxu0 0.0
  %775 = vmatpush1.msra.mxu0 0.0
  %776 = vmatprep.subr.mxu0 0.0
  %777 = vmatpush1.msra.mxu0 0.0
  %778 = vmatprep.subr.mxu0 0.0
  %779 = vmatpush1.msra.mxu0 0.0
  %780 = vmatprep.subr.mxu0 0.0
  %781 = vmatpush1.msra.mxu0 0.0
  %782 = vmatprep.subr.mxu0 0.0
  %783 = vmatpush1.msra.mxu0 %v750
  %784 = vmatprep.subr.mxu0 0.0
  %785 = vmatpush2.msra.mxu0 0.0
  %786 = vmatprep.subr.mxu0 0.0
  %787 = vmatpush2.msra.mxu0 0.0
  %788 = vmatprep.subr.mxu0 0.0
  %789 = vmatpush2.msra.mxu0 0.0
  %790 = vmatprep.subr.mxu0 0.0
  %791 = vmatpush2.msra.mxu0 0.0
  %792 = vmatprep.subr.mxu0 0.0
  %793 = vmatpush2.msra.mxu0 0.0
  %794 = vmatprep.subr.mxu0 0.0
  %795 = vmatpush2.msra.mxu0 0.0
  %796 = vmatprep.subr.mxu0 0.0
  %797 = vmatpush2.msra.mxu0 0.0
  %798 = vmatprep.subr.mxu0 0.0
  %799 = vmatpush2.msra.mxu0 0.0
  %800 = vmatprep.subr.mxu0 0.0
  %801 = vmatpush2.msra.mxu0 0.0
  %802 = vmatprep.subr.mxu0 0.0
  %803 = vmatpush2.msra.mxu0 0.0
  %804 = vmatprep.subr.mxu0 0.0
  %805 = vmatpush2.msra.mxu0 0.0
  %806 = vmatprep.subr.mxu0 0.0
  %807 = vmatpush2.msra.mxu0 0.0
  %808 = vmatprep.subr.mxu0 0.0
  %809 = vmatpush2.msra.mxu0 0.0
  %810 = vmatprep.subr.mxu0 0.0
  %811 = vmatpush2.msra.mxu0 0.0
  %812 = vmatprep.subr.mxu0 0.0
  %813 = vmatpush2.msra.mxu0 0.0
  %814 = vmatprep.subr.mxu0 0.0
  %815 = vmatpush2.msra.mxu0 0.0
  %816 = vmatprep.mubr.f32.mxu0 0.0
  %817 = vmatmul.mubr.f32.gmra.mxu0 %v744
  %v818 = vpop.f32.mrf.mxu0
  %v819 = vadd.f32 %v742, %v818
  %v820 = vpop.f32.mrf.mxu0
  %821 = vmatprep.mubr.f32.mxu0 0.0
  %822 = vmatmul.mubr.f32.gmra.mxu0 %v747
  %v823 = vpop.f32.mrf.mxu0
  %v824 = vadd.f32 %v742, %v823
  %v825 = vpop.f32.mrf.mxu0
  %826 = vdwg.mxu0
  %829 = vrot.lane.b32.xlu0 %v819, 124
  %v830 = vpop.permute.xlu0 %829
  %831 = vrot.lane.b32.xlu0 %v824, 124
  %v832 = vpop.permute.xlu0 %831
  %v833 = vsel %vm18, %v819, 0
  %v835 = vsel %vm18, %v824, 0
  %v837 = vsel %vm18, %v830, 0
  %v839 = vsel %vm18, %v832, 0
  %841 = vmatprep.subr.mxu0 0.0
  %842 = vmatpush1.xpose.msra.mxu0 0.0
  %843 = vmatprep.subr.mxu0 0.0
  %844 = vmatpush1.xpose.msra.mxu0 0.0
  %845 = vmatprep.subr.mxu0 0.0
  %846 = vmatpush1.xpose.msra.mxu0 0.0
  %847 = vmatprep.subr.mxu0 0.0
  %848 = vmatpush1.xpose.msra.mxu0 0.0
  %849 = vmatprep.subr.mxu0 0.0
  %850 = vmatpush1.xpose.msra.mxu0 0.0
  %851 = vmatprep.subr.mxu0 0.0
  %852 = vmatpush1.xpose.msra.mxu0 0.0
  %853 = vmatprep.subr.mxu0 0.0
  %854 = vmatpush1.xpose.msra.mxu0 0.0
  %855 = vmatprep.subr.mxu0 0.0
  %856 = vmatpush1.xpose.msra.mxu0 0.0
  %857 = vmatprep.subr.mxu0 0.0
  %858 = vmatpush1.xpose.msra.mxu0 0.0
  %859 = vmatprep.subr.mxu0 0.0
  %860 = vmatpush1.xpose.msra.mxu0 0.0
  %861 = vmatprep.subr.mxu0 0.0
  %862 = vmatpush1.xpose.msra.mxu0 0.0
  %863 = vmatprep.subr.mxu0 0.0
  %864 = vmatpush1.xpose.msra.mxu0 0.0
  %865 = vmatprep.subr.mxu0 0.0
  %866 = vmatpush1.xpose.msra.mxu0 0.0
  %867 = vmatprep.subr.mxu0 0.0
  %868 = vmatpush1.xpose.msra.mxu0 0.0
  %869 = vmatprep.subr.mxu0 0.0
  %870 = vmatpush1.xpose.msra.mxu0 %v839
  %871 = vmatprep.subr.mxu0 0.0
  %872 = vmatpush1.xpose.msra.mxu0 %v837
  %873 = vmatprep.subr.mxu0 0.0
  %874 = vmatpush2.xpose.msra.mxu0 0.0
  %875 = vmatprep.subr.mxu0 0.0
  %876 = vmatpush2.xpose.msra.mxu0 0.0
  %877 = vmatprep.subr.mxu0 0.0
  %878 = vmatpush2.xpose.msra.mxu0 0.0
  %879 = vmatprep.subr.mxu0 0.0
  %880 = vmatpush2.xpose.msra.mxu0 0.0
  %881 = vmatprep.subr.mxu0 0.0
  %882 = vmatpush2.xpose.msra.mxu0 0.0
  %883 = vmatprep.subr.mxu0 0.0
  %884 = vmatpush2.xpose.msra.mxu0 0.0
  %885 = vmatprep.subr.mxu0 0.0
  %886 = vmatpush2.xpose.msra.mxu0 0.0
  %887 = vmatprep.subr.mxu0 0.0
  %888 = vmatpush2.xpose.msra.mxu0 0.0
  %889 = vmatprep.subr.mxu0 0.0
  %890 = vmatpush2.xpose.msra.mxu0 0.0
  %891 = vmatprep.subr.mxu0 0.0
  %892 = vmatpush2.xpose.msra.mxu0 0.0
  %893 = vmatprep.subr.mxu0 0.0
  %894 = vmatpush2.xpose.msra.mxu0 0.0
  %895 = vmatprep.subr.mxu0 0.0
  %896 = vmatpush2.xpose.msra.mxu0 0.0
  %897 = vmatprep.subr.mxu0 0.0
  %898 = vmatpush2.xpose.msra.mxu0 0.0
  %899 = vmatprep.subr.mxu0 0.0
  %900 = vmatpush2.xpose.msra.mxu0 0.0
  %901 = vmatprep.subr.mxu0 0.0
  %902 = vmatpush2.xpose.msra.mxu0 0.0
  %903 = vmatprep.subr.mxu0 0.0
  %904 = vmatpush2.xpose.msra.mxu0 0.0
  %905 = vmatprep.mubr.f32.mxu0 0.0
  %906 = vmatmul.mubr.f32.gmra.mxu0 %v833
  %v907 = vpop.f32.mrf.mxu0
  %v908 = vadd.f32 %v11, %v907
  %v909 = vpop.f32.mrf.mxu0
  %910 = vmatprep.mubr.f32.mxu0 0.0
  %911 = vmatmul.mubr.f32.gmra.mxu0 %v835
  %v912 = vpop.f32.mrf.mxu0
  %v913 = vadd.f32 %v12, %v912
  %v914 = vpop.f32.mrf.mxu0
  %915 = vdwg.mxu0
  %v916 = vsel %vm285, %v908, -inf
  %917 = vmax.xlane.f32.xlu0 %v916
  %v918 = vpop.xlane.xlu0 %917
  %v919 = vsel %vm285, %v913, -inf
  %920 = vmax.xlane.f32.xlu0 %v919
  %v921 = vpop.xlane.xlu0 %920
  %v922 = vsub.f32 %v908, %v918
  %v923 = vsub.f32 %v913, %v921
  %v924 = vmul.f32 %v922, 1.442695
  %v925 = vpow.pop %v924
  %v926 = vmul.f32 %v923, 1.442695
  %v927 = vpow.pop %v926
  %v928 = vsel %vm285, %v925, 0.0
  %929 = vadd.xlane.f32.xlu0 %v928
  %v930 = vpop.xlane.xlu0 %929
  %v931 = vsel %vm285, %v927, 0.0
  %932 = vadd.xlane.f32.xlu0 %v931
  %v933 = vpop.xlane.xlu0 %932
  %v934 = vrcp.pop %v930
  %v935 = vrcp.pop %v933
  %v936 = vmul.f32 %v925, %v934
  %v937 = vmul.f32 %v927, %v935
  %938 = vrot.lane.b32.xlu0 %v819, 120
  %v939 = vpop.permute.xlu0 %938
  %940 = vrot.lane.b32.xlu0 %v824, 120
  %v941 = vpop.permute.xlu0 %940
  %v945 = vsel %vm285, %v936, 0
  %v948 = vsel %vm285, %v937, 0
  %950 = vmatprep.subr.mxu0 0.0
  %951 = vmatpush1.msra.mxu0 0.0
  %952 = vmatprep.subr.mxu0 0.0
  %953 = vmatpush1.msra.mxu0 0.0
  %954 = vmatprep.subr.mxu0 0.0
  %955 = vmatpush1.msra.mxu0 0.0
  %956 = vmatprep.subr.mxu0 0.0
  %957 = vmatpush1.msra.mxu0 0.0
  %958 = vmatprep.subr.mxu0 0.0
  %959 = vmatpush1.msra.mxu0 0.0
  %960 = vmatprep.subr.mxu0 0.0
  %961 = vmatpush1.msra.mxu0 0.0
  %962 = vmatprep.subr.mxu0 0.0
  %963 = vmatpush1.msra.mxu0 0.0
  %964 = vmatprep.subr.mxu0 0.0
  %965 = vmatpush1.msra.mxu0 0.0
  %966 = vmatprep.subr.mxu0 0.0
  %967 = vmatpush1.msra.mxu0 0.0
  %968 = vmatprep.subr.mxu0 0.0
  %969 = vmatpush1.msra.mxu0 0.0
  %970 = vmatprep.subr.mxu0 0.0
  %971 = vmatpush1.msra.mxu0 0.0
  %972 = vmatprep.subr.mxu0 0.0
  %973 = vmatpush1.msra.mxu0 0.0
  %974 = vmatprep.subr.mxu0 0.0
  %975 = vmatpush1.msra.mxu0 0.0
  %976 = vmatprep.subr.mxu0 0.0
  %977 = vmatpush1.msra.mxu0 0.0
  %978 = vmatprep.subr.mxu0 0.0
  %979 = vmatpush1.msra.mxu0 %v941
  %980 = vmatprep.subr.mxu0 0.0
  %981 = vmatpush1.msra.mxu0 %v939
  %982 = vmatprep.subr.mxu0 0.0
  %983 = vmatpush2.msra.mxu0 0.0
  %984 = vmatprep.subr.mxu0 0.0
  %985 = vmatpush2.msra.mxu0 0.0
  %986 = vmatprep.subr.mxu0 0.0
  %987 = vmatpush2.msra.mxu0 0.0
  %988 = vmatprep.subr.mxu0 0.0
  %989 = vmatpush2.msra.mxu0 0.0
  %990 = vmatprep.subr.mxu0 0.0
  %991 = vmatpush2.msra.mxu0 0.0
  %992 = vmatprep.subr.mxu0 0.0
  %993 = vmatpush2.msra.mxu0 0.0
  %994 = vmatprep.subr.mxu0 0.0
  %995 = vmatpush2.msra.mxu0 0.0
  %996 = vmatprep.subr.mxu0 0.0
  %997 = vmatpush2.msra.mxu0 0.0
  %998 = vmatprep.subr.mxu0 0.0
  %999 = vmatpush2.msra.mxu0 0.0
  %1000 = vmatprep.subr.mxu0 0.0
  %1001 = vmatpush2.msra.mxu0 0.0
  %1002 = vmatprep.subr.mxu0 0.0
  %1003 = vmatpush2.msra.mxu0 0.0
  %1004 = vmatprep.subr.mxu0 0.0
  %1005 = vmatpush2.msra.mxu0 0.0
  %1006 = vmatprep.subr.mxu0 0.0
  %1007 = vmatpush2.msra.mxu0 0.0
  %1008 = vmatprep.subr.mxu0 0.0
  %1009 = vmatpush2.msra.mxu0 0.0
  %1010 = vmatprep.subr.mxu0 0.0
  %1011 = vmatpush2.msra.mxu0 0.0
  %1012 = vmatprep.subr.mxu0 0.0
  %1013 = vmatpush2.msra.mxu0 0.0
  %1014 = vmatprep.mubr.f32.mxu0 0.0
  %1015 = vmatmul.mubr.f32.gmra.mxu0 %v945
  %v1016 = vpop.f32.mrf.mxu0
  %v1017 = vadd.f32 0.0, %v1016
  %v1018 = vpop.f32.mrf.mxu0
  %1019 = vmatprep.mubr.f32.mxu0 0.0
  %1020 = vmatmul.mubr.f32.gmra.mxu0 %v948
  %v1021 = vpop.f32.mrf.mxu0
  %v1022 = vadd.f32 0.0, %v1021
  %v1023 = vpop.f32.mrf.mxu0
  %1024 = vdwg.mxu0
  %1025 = vrot.lane.b32.xlu0 %v735, 116
  %v1026 = vpop.permute.xlu0 %1025
  %1028 = vrot.lane.b32.xlu0 %v742, 116
  %v1029 = vpop.permute.xlu0 %1028
  %v1032 = vsel %vm18, %v1017, 0
  %v1035 = vsel %vm18, %v1022, 0
  %v1037 = vsel %vm25, %v1026, 0
  %1039 = vmatprep.subr.mxu0 0.0
  %1040 = vmatpush1.msra.mxu0 0.0
  %1041 = vmatprep.subr.mxu0 0.0
  %1042 = vmatpush1.msra.mxu0 0.0
  %1043 = vmatprep.subr.mxu0 0.0
  %1044 = vmatpush1.msra.mxu0 0.0
  %1045 = vmatprep.subr.mxu0 0.0
  %1046 = vmatpush1.msra.mxu0 0.0
  %1047 = vmatprep.subr.mxu0 0.0
  %1048 = vmatpush1.msra.mxu0 0.0
  %1049 = vmatprep.subr.mxu0 0.0
  %1050 = vmatpush1.msra.mxu0 0.0
  %1051 = vmatprep.subr.mxu0 0.0
  %1052 = vmatpush1.msra.mxu0 0.0
  %1053 = vmatprep.subr.mxu0 0.0
  %1054 = vmatpush1.msra.mxu0 0.0
  %1055 = vmatprep.subr.mxu0 0.0
  %1056 = vmatpush1.msra.mxu0 0.0
  %1057 = vmatprep.subr.mxu0 0.0
  %1058 = vmatpush1.msra.mxu0 0.0
  %1059 = vmatprep.subr.mxu0 0.0
  %1060 = vmatpush1.msra.mxu0 0.0
  %1061 = vmatprep.subr.mxu0 0.0
  %1062 = vmatpush1.msra.mxu0 0.0
  %1063 = vmatprep.subr.mxu0 0.0
  %1064 = vmatpush1.msra.mxu0 0.0
  %1065 = vmatprep.subr.mxu0 0.0
  %1066 = vmatpush1.msra.mxu0 0.0
  %1067 = vmatprep.subr.mxu0 0.0
  %1068 = vmatpush1.msra.mxu0 0.0
  %1069 = vmatprep.subr.mxu0 0.0
  %1070 = vmatpush1.msra.mxu0 %v1037
  %1071 = vmatprep.subr.mxu0 0.0
  %1072 = vmatpush2.msra.mxu0 0.0
  %1073 = vmatprep.subr.mxu0 0.0
  %1074 = vmatpush2.msra.mxu0 0.0
  %1075 = vmatprep.subr.mxu0 0.0
  %1076 = vmatpush2.msra.mxu0 0.0
  %1077 = vmatprep.subr.mxu0 0.0
  %1078 = vmatpush2.msra.mxu0 0.0
  %1079 = vmatprep.subr.mxu0 0.0
  %1080 = vmatpush2.msra.mxu0 0.0
  %1081 = vmatprep.subr.mxu0 0.0
  %1082 = vmatpush2.msra.mxu0 0.0
  %1083 = vmatprep.subr.mxu0 0.0
  %1084 = vmatpush2.msra.mxu0 0.0
  %1085 = vmatprep.subr.mxu0 0.0
  %1086 = vmatpush2.msra.mxu0 0.0
  %1087 = vmatprep.subr.mxu0 0.0
  %1088 = vmatpush2.msra.mxu0 0.0
  %1089 = vmatprep.subr.mxu0 0.0
  %1090 = vmatpush2.msra.mxu0 0.0
  %1091 = vmatprep.subr.mxu0 0.0
  %1092 = vmatpush2.msra.mxu0 0.0
  %1093 = vmatprep.subr.mxu0 0.0
  %1094 = vmatpush2.msra.mxu0 0.0
  %1095 = vmatprep.subr.mxu0 0.0
  %1096 = vmatpush2.msra.mxu0 0.0
  %1097 = vmatprep.subr.mxu0 0.0
  %1098 = vmatpush2.msra.mxu0 0.0
  %1099 = vmatprep.subr.mxu0 0.0
  %1100 = vmatpush2.msra.mxu0 0.0
  %1101 = vmatprep.subr.mxu0 0.0
  %1102 = vmatpush2.msra.mxu0 0.0
  %1103 = vmatprep.mubr.f32.mxu0 0.0
  %1104 = vmatmul.mubr.f32.gmra.mxu0 %v1032
  %v1105 = vpop.f32.mrf.mxu0
  %v1106 = vadd.f32 %v1029, %v1105
  %v1107 = vpop.f32.mrf.mxu0
  %1108 = vmatprep.mubr.f32.mxu0 0.0
  %1109 = vmatmul.mubr.f32.gmra.mxu0 %v1035
  %v1110 = vpop.f32.mrf.mxu0
  %v1111 = vadd.f32 %v1029, %v1110
  %v1112 = vpop.f32.mrf.mxu0
  %1113 = vdwg.mxu0
  %v1114 = vadd.f32 %v733, %v1106
  %v1115 = vadd.f32 %v734, %v1111
  %v1116 = vsel %vm18, %v1114, 0.0
  %1117 = vadd.xlane.f32.xlu0 %v1116
  %v1118 = vpop.xlane.xlu0 %1117
  %v1119 = vsel %vm18, %v1115, 0.0
  %1120 = vadd.xlane.f32.xlu0 %v1119
  %v1121 = vpop.xlane.xlu0 %1120
  %v1122 = vmul.f32 %v1118, %v492
  %v1123 = vmul.f32 %v1121, %v492
  %v1124 = vsub.f32 %v1114, %v1122
  %v1125 = vsub.f32 %v1115, %v1123
  %v1126 = vmul.f32 %v1124, %v1124
  %v1127 = vmul.f32 %v1125, %v1125
  %v1128 = vsel %vm18, %v1126, 0.0
  %1129 = vadd.xlane.f32.xlu0 %v1128
  %v1130 = vpop.xlane.xlu0 %1129
  %v1131 = vsel %vm18, %v1127, 0.0
  %1132 = vadd.xlane.f32.xlu0 %v1131
  %v1133 = vpop.xlane.xlu0 %1132
  %v1134 = vmul.f32 %v1130, %v492
  %v1135 = vmul.f32 %v1133, %v492
  %v1136 = vadd.f32 %v1134, 1e-05
  %v1137 = vadd.f32 %v1135, 1e-05
  %v1138 = vrsqrt.pop %v1136
  %v1139 = vrsqrt.pop %v1137
  %v1140 = vmul.f32 %v1124, %v1138
  %v1141 = vmul.f32 %v1125, %v1139
  %1142 = vrot.lane.b32.xlu0 %v742, 92
  %v1143 = vpop.permute.xlu0 %1142
  %v1145 = vmul.f32 %v1140, %v1143
  %v1146 = vmul.f32 %v1141, %v1143
  %1147 = vrot.lane.b32.xlu0 %v742, 88
  %v1148 = vpop.permute.xlu0 %1147
  %v1150 = vadd.f32 %v1145, %v1148
  %v1151 = vadd.f32 %v1146, %v1148
  %1152 = vrot.lane.b32.xlu0 %v735, 112
  %v1153 = vpop.permute.xlu0 %1152
  %1154 = vrot.lane.b32.xlu0 %v742, 112
  %v1155 = vpop.permute.xlu0 %1154
  %v1158 = vsel %vm18, %v1150, 0
  %v1161 = vsel %vm18, %v1151, 0
  %v1163 = vsel %vm25, %v1153, 0
  %1165 = vmatprep.subr.mxu0 0.0
  %1166 = vmatpush1.msra.mxu0 0.0
  %1167 = vmatprep.subr.mxu0 0.0
  %1168 = vmatpush1.msra.mxu0 0.0
  %1169 = vmatprep.subr.mxu0 0.0
  %1170 = vmatpush1.msra.mxu0 0.0
  %1171 = vmatprep.subr.mxu0 0.0
  %1172 = vmatpush1.msra.mxu0 0.0
  %1173 = vmatprep.subr.mxu0 0.0
  %1174 = vmatpush1.msra.mxu0 0.0
  %1175 = vmatprep.subr.mxu0 0.0
  %1176 = vmatpush1.msra.mxu0 0.0
  %1177 = vmatprep.subr.mxu0 0.0
  %1178 = vmatpush1.msra.mxu0 0.0
  %1179 = vmatprep.subr.mxu0 0.0
  %1180 = vmatpush1.msra.mxu0 0.0
  %1181 = vmatprep.subr.mxu0 0.0
  %1182 = vmatpush1.msra.mxu0 0.0
  %1183 = vmatprep.subr.mxu0 0.0
  %1184 = vmatpush1.msra.mxu0 0.0
  %1185 = vmatprep.subr.mxu0 0.0
  %1186 = vmatpush1.msra.mxu0 0.0
  %1187 = vmatprep.subr.mxu0 0.0
  %1188 = vmatpush1.msra.mxu0 0.0
  %1189 = vmatprep.subr.mxu0 0.0
  %1190 = vmatpush1.msra.mxu0 0.0
  %1191 = vmatprep.subr.mxu0 0.0
  %1192 = vmatpush1.msra.mxu0 0.0
  %1193 = vmatprep.subr.mxu0 0.0
  %1194 = vmatpush1.msra.mxu0 0.0
  %1195 = vmatprep.subr.mxu0 0.0
  %1196 = vmatpush1.msra.mxu0 %v1163
  %1197 = vmatprep.subr.mxu0 0.0
  %1198 = vmatpush2.msra.mxu0 0.0
  %1199 = vmatprep.subr.mxu0 0.0
  %1200 = vmatpush2.msra.mxu0 0.0
  %1201 = vmatprep.subr.mxu0 0.0
  %1202 = vmatpush2.msra.mxu0 0.0
  %1203 = vmatprep.subr.mxu0 0.0
  %1204 = vmatpush2.msra.mxu0 0.0
  %1205 = vmatprep.subr.mxu0 0.0
  %1206 = vmatpush2.msra.mxu0 0.0
  %1207 = vmatprep.subr.mxu0 0.0
  %1208 = vmatpush2.msra.mxu0 0.0
  %1209 = vmatprep.subr.mxu0 0.0
  %1210 = vmatpush2.msra.mxu0 0.0
  %1211 = vmatprep.subr.mxu0 0.0
  %1212 = vmatpush2.msra.mxu0 0.0
  %1213 = vmatprep.subr.mxu0 0.0
  %1214 = vmatpush2.msra.mxu0 0.0
  %1215 = vmatprep.subr.mxu0 0.0
  %1216 = vmatpush2.msra.mxu0 0.0
  %1217 = vmatprep.subr.mxu0 0.0
  %1218 = vmatpush2.msra.mxu0 0.0
  %1219 = vmatprep.subr.mxu0 0.0
  %1220 = vmatpush2.msra.mxu0 0.0
  %1221 = vmatprep.subr.mxu0 0.0
  %1222 = vmatpush2.msra.mxu0 0.0
  %1223 = vmatprep.subr.mxu0 0.0
  %1224 = vmatpush2.msra.mxu0 0.0
  %1225 = vmatprep.subr.mxu0 0.0
  %1226 = vmatpush2.msra.mxu0 0.0
  %1227 = vmatprep.subr.mxu0 0.0
  %1228 = vmatpush2.msra.mxu0 0.0
  %1229 = vmatprep.mubr.f32.mxu0 0.0
  %1230 = vmatmul.mubr.f32.gmra.mxu0 %v1158
  %v1231 = vpop.f32.mrf.mxu0
  %v1232 = vadd.f32 %v1155, %v1231
  %v1233 = vpop.f32.mrf.mxu0
  %1234 = vmatprep.mubr.f32.mxu0 0.0
  %1235 = vmatmul.mubr.f32.gmra.mxu0 %v1161
  %v1236 = vpop.f32.mrf.mxu0
  %v1237 = vadd.f32 %v1155, %v1236
  %v1238 = vpop.f32.mrf.mxu0
  %1239 = vdwg.mxu0
  %v1240 = vmax.f32 %v1232, 0.0
  %v1241 = vmax.f32 %v1237, 0.0
  %1242 = vrot.lane.b32.xlu0 %v742, 96
  %v1243 = vpop.permute.xlu0 %1242
  %v1246 = vsel %vm285, %v1240, 0
  %v1249 = vsel %vm285, %v1241, 0
  %1251 = vmatprep.subr.mxu0 0.0
  %1252 = vmatpush1.msra.mxu0 0.0
  %1253 = vmatprep.subr.mxu0 0.0
  %1254 = vmatpush1.msra.mxu0 0.0
  %1255 = vmatprep.subr.mxu0 0.0
  %1256 = vmatpush1.msra.mxu0 0.0
  %1257 = vmatprep.subr.mxu0 0.0
  %1258 = vmatpush1.msra.mxu0 0.0
  %1259 = vmatprep.subr.mxu0 0.0
  %1260 = vmatpush1.msra.mxu0 0.0
  %1261 = vmatprep.subr.mxu0 0.0
  %1262 = vmatpush1.msra.mxu0 0.0
  %1263 = vmatprep.subr.mxu0 0.0
  %1264 = vmatpush1.msra.mxu0 0.0
  %1265 = vmatprep.subr.mxu0 0.0
  %1266 = vmatpush1.msra.mxu0 0.0
  %1267 = vmatprep.subr.mxu0 0.0
  %1268 = vmatpush1.msra.mxu0 0.0
  %1269 = vmatprep.subr.mxu0 0.0
  %1270 = vmatpush1.msra.mxu0 0.0
  %1271 = vmatprep.subr.mxu0 0.0
  %1272 = vmatpush1.msra.mxu0 0.0
  %1273 = vmatprep.subr.mxu0 0.0
  %1274 = vmatpush1.msra.mxu0 0.0
  %1275 = vmatprep.subr.mxu0 0.0
  %1276 = vmatpush1.msra.mxu0 0.0
  %1277 = vmatprep.subr.mxu0 0.0
  %1278 = vmatpush1.msra.mxu0 0.0
  %1279 = vmatprep.subr.mxu0 0.0
  %1280 = vmatpush1.msra.mxu0 %v737
  %1281 = vmatprep.subr.mxu0 0.0
  %1282 = vmatpush1.msra.mxu0 %v736
  %1283 = vmatprep.subr.mxu0 0.0
  %1284 = vmatpush2.msra.mxu0 0.0
  %1285 = vmatprep.subr.mxu0 0.0
  %1286 = vmatpush2.msra.mxu0 0.0
  %1287 = vmatprep.subr.mxu0 0.0
  %1288 = vmatpush2.msra.mxu0 0.0
  %1289 = vmatprep.subr.mxu0 0.0
  %1290 = vmatpush2.msra.mxu0 0.0
  %1291 = vmatprep.subr.mxu0 0.0
  %1292 = vmatpush2.msra.mxu0 0.0
  %1293 = vmatprep.subr.mxu0 0.0
  %1294 = vmatpush2.msra.mxu0 0.0
  %1295 = vmatprep.subr.mxu0 0.0
  %1296 = vmatpush2.msra.mxu0 0.0
  %1297 = vmatprep.subr.mxu0 0.0
  %1298 = vmatpush2.msra.mxu0 0.0
  %1299 = vmatprep.subr.mxu0 0.0
  %1300 = vmatpush2.msra.mxu0 0.0
  %1301 = vmatprep.subr.mxu0 0.0
  %1302 = vmatpush2.msra.mxu0 0.0
  %1303 = vmatprep.subr.mxu0 0.0
  %1304 = vmatpush2.msra.mxu0 0.0
  %1305 = vmatprep.subr.mxu0 0.0
  %1306 = vmatpush2.msra.mxu0 0.0
  %1307 = vmatprep.subr.mxu0 0.0
  %1308 = vmatpush2.msra.mxu0 0.0
  %1309 = vmatprep.subr.mxu0 0.0
  %1310 = vmatpush2.msra.mxu0 0.0
  %1311 = vmatprep.subr.mxu0 0.0
  %1312 = vmatpush2.msra.mxu0 0.0
  %1313 = vmatprep.subr.mxu0 0.0
  %1314 = vmatpush2.msra.mxu0 0.0
  %1315 = vmatprep.mubr.f32.mxu0 0.0
  %1316 = vmatmul.mubr.f32.gmra.mxu0 %v1246
  %v1317 = vpop.f32.mrf.mxu0
  %v1318 = vadd.f32 %v1243, %v1317
  %v1319 = vpop.f32.mrf.mxu0
  %1320 = vmatprep.mubr.f32.mxu0 0.0
  %1321 = vmatmul.mubr.f32.gmra.mxu0 %v1249
  %v1322 = vpop.f32.mrf.mxu0
  %v1323 = vadd.f32 %v1243, %v1322
  %v1324 = vpop.f32.mrf.mxu0
  %1325 = vdwg.mxu0
  %v1326 = vadd.f32 %v1150, %v1318
  %v1327 = vadd.f32 %v1151, %v1323
  %v1328 = vsel %vm18, %v1326, 0.0
  %1329 = vadd.xlane.f32.xlu0 %v1328
  %v1330 = vpop.xlane.xlu0 %1329
  %v1331 = vsel %vm18, %v1327, 0.0
  %1332 = vadd.xlane.f32.xlu0 %v1331
  %v1333 = vpop.xlane.xlu0 %1332
  %v1334 = vmul.f32 %v1330, %v492
  %v1335 = vmul.f32 %v1333, %v492
  %v1336 = vsub.f32 %v1326, %v1334
  %v1337 = vsub.f32 %v1327, %v1335
  %v1338 = vmul.f32 %v1336, %v1336
  %v1339 = vmul.f32 %v1337, %v1337
  %v1340 = vsel %vm18, %v1338, 0.0
  %1341 = vadd.xlane.f32.xlu0 %v1340
  %v1342 = vpop.xlane.xlu0 %1341
  %v1343 = vsel %vm18, %v1339, 0.0
  %1344 = vadd.xlane.f32.xlu0 %v1343
  %v1345 = vpop.xlane.xlu0 %1344
  %v1346 = vmul.f32 %v1342, %v492
  %v1347 = vmul.f32 %v1345, %v492
  %v1348 = vadd.f32 %v1346, 1e-05
  %v1349 = vadd.f32 %v1347, 1e-05
  %v1350 = vrsqrt.pop %v1348
  %v1351 = vrsqrt.pop %v1349
  %v1352 = vmul.f32 %v1336, %v1350
  %v1353 = vmul.f32 %v1337, %v1351
  %1354 = vrot.lane.b32.xlu0 %v742, 84
  %v1355 = vpop.permute.xlu0 %1354
  %v1357 = vmul.f32 %v1352, %v1355
  %v1358 = vmul.f32 %v1353, %v1355
  %1359 = vrot.lane.b32.xlu0 %v742, 80
  %v1360 = vpop.permute.xlu0 %1359
  %v1362 = vadd.f32 %v1357, %v1360
  %v1363 = vadd.f32 %v1358, %v1360
  %v1364 = vld [vmem:[%s1 + $0x38] sm:$0xf]
  %v1365 = vld [vmem:[%s1 + $0x60] sm:$0xff]
  %v1366 = vld [vmem:[%s1 + $0x68] sm:$0xff]
  %v1367 = vld [vmem:[%s1 + $0x72] sm:$0x1]
  %v1368 = vlaneseq
  %v1369 = vshrl.u32 %v1368, 7
  %v1370 = vsub.s32 0, %v1369
  %v1371 = vrot.slane %v1367, %v1370
  %v1373 = vsel %vm18, %v1362, 0
  %v1376 = vsel %vm18, %v1363, 0
  %v1379 = vsel %vm25, %v1364, 0
  %1381 = vmatprep.subr.mxu0 0.0
  %1382 = vmatpush1.msra.mxu0 0.0
  %1383 = vmatprep.subr.mxu0 0.0
  %1384 = vmatpush1.msra.mxu0 0.0
  %1385 = vmatprep.subr.mxu0 0.0
  %1386 = vmatpush1.msra.mxu0 0.0
  %1387 = vmatprep.subr.mxu0 0.0
  %1388 = vmatpush1.msra.mxu0 0.0
  %1389 = vmatprep.subr.mxu0 0.0
  %1390 = vmatpush1.msra.mxu0 0.0
  %1391 = vmatprep.subr.mxu0 0.0
  %1392 = vmatpush1.msra.mxu0 0.0
  %1393 = vmatprep.subr.mxu0 0.0
  %1394 = vmatpush1.msra.mxu0 0.0
  %1395 = vmatprep.subr.mxu0 0.0
  %1396 = vmatpush1.msra.mxu0 0.0
  %1397 = vmatprep.subr.mxu0 0.0
  %1398 = vmatpush1.msra.mxu0 0.0
  %1399 = vmatprep.subr.mxu0 0.0
  %1400 = vmatpush1.msra.mxu0 0.0
  %1401 = vmatprep.subr.mxu0 0.0
  %1402 = vmatpush1.msra.mxu0 0.0
  %1403 = vmatprep.subr.mxu0 0.0
  %1404 = vmatpush1.msra.mxu0 0.0
  %1405 = vmatprep.subr.mxu0 0.0
  %1406 = vmatpush1.msra.mxu0 0.0
  %1407 = vmatprep.subr.mxu0 0.0
  %1408 = vmatpush1.msra.mxu0 0.0
  %1409 = vmatprep.subr.mxu0 0.0
  %1410 = vmatpush1.msra.mxu0 0.0
  %1411 = vmatprep.subr.mxu0 0.0
  %1412 = vmatpush1.msra.mxu0 %v1379
  %1413 = vmatprep.subr.mxu0 0.0
  %1414 = vmatpush2.msra.mxu0 0.0
  %1415 = vmatprep.subr.mxu0 0.0
  %1416 = vmatpush2.msra.mxu0 0.0
  %1417 = vmatprep.subr.mxu0 0.0
  %1418 = vmatpush2.msra.mxu0 0.0
  %1419 = vmatprep.subr.mxu0 0.0
  %1420 = vmatpush2.msra.mxu0 0.0
  %1421 = vmatprep.subr.mxu0 0.0
  %1422 = vmatpush2.msra.mxu0 0.0
  %1423 = vmatprep.subr.mxu0 0.0
  %1424 = vmatpush2.msra.mxu0 0.0
  %1425 = vmatprep.subr.mxu0 0.0
  %1426 = vmatpush2.msra.mxu0 0.0
  %1427 = vmatprep.subr.mxu0 0.0
  %1428 = vmatpush2.msra.mxu0 0.0
  %1429 = vmatprep.subr.mxu0 0.0
  %1430 = vmatpush2.msra.mxu0 0.0
  %1431 = vmatprep.subr.mxu0 0.0
  %1432 = vmatpush2.msra.mxu0 0.0
  %1433 = vmatprep.subr.mxu0 0.0
  %1434 = vmatpush2.msra.mxu0 0.0
  %1435 = vmatprep.subr.mxu0 0.0
  %1436 = vmatpush2.msra.mxu0 0.0
  %1437 = vmatprep.subr.mxu0 0.0
  %1438 = vmatpush2.msra.mxu0 0.0
  %1439 = vmatprep.subr.mxu0 0.0
  %1440 = vmatpush2.msra.mxu0 0.0
  %1441 = vmatprep.subr.mxu0 0.0
  %1442 = vmatpush2.msra.mxu0 0.0
  %1443 = vmatprep.subr.mxu0 0.0
  %1444 = vmatpush2.msra.mxu0 0.0
  %1445 = vmatprep.mubr.f32.mxu0 0.0
  %1446 = vmatmul.mubr.f32.gmra.mxu0 %v1373
  %v1447 = vpop.f32.mrf.mxu0
  %v1448 = vadd.f32 %v1371, %v1447
  %v1449 = vpop.f32.mrf.mxu0
  %1450 = vmatprep.mubr.f32.mxu0 0.0
  %1451 = vmatmul.mubr.f32.gmra.mxu0 %v1376
  %v1452 = vpop.f32.mrf.mxu0
  %v1453 = vadd.f32 %v1371, %v1452
  %v1454 = vpop.f32.mrf.mxu0
  %1455 = vdwg.mxu0
  %1458 = vrot.lane.b32.xlu0 %v1448, 124
  %v1459 = vpop.permute.xlu0 %1458
  %1460 = vrot.lane.b32.xlu0 %v1453, 124
  %v1461 = vpop.permute.xlu0 %1460
  %v1462 = vsel %vm18, %v1448, 0
  %v1464 = vsel %vm18, %v1453, 0
  %v1466 = vsel %vm18, %v1459, 0
  %v1468 = vsel %vm18, %v1461, 0
  %1470 = vmatprep.subr.mxu0 0.0
  %1471 = vmatpush1.xpose.msra.mxu0 0.0
  %1472 = vmatprep.subr.mxu0 0.0
  %1473 = vmatpush1.xpose.msra.mxu0 0.0
  %1474 = vmatprep.subr.mxu0 0.0
  %1475 = vmatpush1.xpose.msra.mxu0 0.0
  %1476 = vmatprep.subr.mxu0 0.0
  %1477 = vmatpush1.xpose.msra.mxu0 0.0
  %1478 = vmatprep.subr.mxu0 0.0
  %1479 = vmatpush1.xpose.msra.mxu0 0.0
  %1480 = vmatprep.subr.mxu0 0.0
  %1481 = vmatpush1.xpose.msra.mxu0 0.0
  %1482 = vmatprep.subr.mxu0 0.0
  %1483 = vmatpush1.xpose.msra.mxu0 0.0
  %1484 = vmatprep.subr.mxu0 0.0
  %1485 = vmatpush1.xpose.msra.mxu0 0.0
  %1486 = vmatprep.subr.mxu0 0.0
  %1487 = vmatpush1.xpose.msra.mxu0 0.0
  %1488 = vmatprep.subr.mxu0 0.0
  %1489 = vmatpush1.xpose.msra.mxu0 0.0
  %1490 = vmatprep.subr.mxu0 0.0
  %1491 = vmatpush1.xpose.msra.mxu0 0.0
  %1492 = vmatprep.subr.mxu0 0.0
  %1493 = vmatpush1.xpose.msra.mxu0 0.0
  %1494 = vmatprep.subr.mxu0 0.0
  %1495 = vmatpush1.xpose.msra.mxu0 0.0
  %1496 = vmatprep.subr.mxu0 0.0
  %1497 = vmatpush1.xpose.msra.mxu0 0.0
  %1498 = vmatprep.subr.mxu0 0.0
  %1499 = vmatpush1.xpose.msra.mxu0 %v1468
  %1500 = vmatprep.subr.mxu0 0.0
  %1501 = vmatpush1.xpose.msra.mxu0 %v1466
  %1502 = vmatprep.subr.mxu0 0.0
  %1503 = vmatpush2.xpose.msra.mxu0 0.0
  %1504 = vmatprep.subr.mxu0 0.0
  %1505 = vmatpush2.xpose.msra.mxu0 0.0
  %1506 = vmatprep.subr.mxu0 0.0
  %1507 = vmatpush2.xpose.msra.mxu0 0.0
  %1508 = vmatprep.subr.mxu0 0.0
  %1509 = vmatpush2.xpose.msra.mxu0 0.0
  %1510 = vmatprep.subr.mxu0 0.0
  %1511 = vmatpush2.xpose.msra.mxu0 0.0
  %1512 = vmatprep.subr.mxu0 0.0
  %1513 = vmatpush2.xpose.msra.mxu0 0.0
  %1514 = vmatprep.subr.mxu0 0.0
  %1515 = vmatpush2.xpose.msra.mxu0 0.0
  %1516 = vmatprep.subr.mxu0 0.0
  %1517 = vmatpush2.xpose.msra.mxu0 0.0
  %1518 = vmatprep.subr.mxu0 0.0
  %1519 = vmatpush2.xpose.msra.mxu0 0.0
  %1520 = vmatprep.subr.mxu0 0.0
  %1521 = vmatpush2.xpose.msra.mxu0 0.0
  %1522 = vmatprep.subr.mxu0 0.0
  %1523 = vmatpush2.xpose.msra.mxu0 0.0
  %1524 = vmatprep.subr.mxu0 0.0
  %1525 = vmatpush2.xpose.msra.mxu0 0.0
  %1526 = vmatprep.subr.mxu0 0.0
  %1527 = vmatpush2.xpose.msra.mxu0 0.0
  %1528 = vmatprep.subr.mxu0 0.0
  %1529 = vmatpush2.xpose.msra.mxu0 0.0
  %1530 = vmatprep.subr.mxu0 0.0
  %1531 = vmatpush2.xpose.msra.mxu0 0.0
  %1532 = vmatprep.subr.mxu0 0.0
  %1533 = vmatpush2.xpose.msra.mxu0 0.0
  %1534 = vmatprep.mubr.f32.mxu0 0.0
  %1535 = vmatmul.mubr.f32.gmra.mxu0 %v1462
  %v1536 = vpop.f32.mrf.mxu0
  %v1537 = vadd.f32 %v11, %v1536
  %v1538 = vpop.f32.mrf.mxu0
  %1539 = vmatprep.mubr.f32.mxu0 0.0
  %1540 = vmatmul.mubr.f32.gmra.mxu0 %v1464
  %v1541 = vpop.f32.mrf.mxu0
  %v1542 = vadd.f32 %v12, %v1541
  %v1543 = vpop.f32.mrf.mxu0
  %1544 = vdwg.mxu0
  %v1545 = vsel %vm285, %v1537, -inf
  %1546 = vmax.xlane.f32.xlu0 %v1545
  %v1547 = vpop.xlane.xlu0 %1546
  %v1548 = vsel %vm285, %v1542, -inf
  %1549 = vmax.xlane.f32.xlu0 %v1548
  %v1550 = vpop.xlane.xlu0 %1549
  %v1551 = vsub.f32 %v1537, %v1547
  %v1552 = vsub.f32 %v1542, %v1550
  %v1553 = vmul.f32 %v1551, 1.442695
  %v1554 = vpow.pop %v1553
  %v1555 = vmul.f32 %v1552, 1.442695
  %v1556 = vpow.pop %v1555
  %v1557 = vsel %vm285, %v1554, 0.0
  %1558 = vadd.xlane.f32.xlu0 %v1557
  %v1559 = vpop.xlane.xlu0 %1558
  %v1560 = vsel %vm285, %v1556, 0.0
  %1561 = vadd.xlane.f32.xlu0 %v1560
  %v1562 = vpop.xlane.xlu0 %1561
  %v1563 = vrcp.pop %v1559
  %v1564 = vrcp.pop %v1562
  %v1565 = vmul.f32 %v1554, %v1563
  %v1566 = vmul.f32 %v1556, %v1564
  %1567 = vrot.lane.b32.xlu0 %v1448, 120
  %v1568 = vpop.permute.xlu0 %1567
  %1569 = vrot.lane.b32.xlu0 %v1453, 120
  %v1570 = vpop.permute.xlu0 %1569
  %v1574 = vsel %vm285, %v1565, 0
  %v1577 = vsel %vm285, %v1566, 0
  %1579 = vmatprep.subr.mxu0 0.0
  %1580 = vmatpush1.msra.mxu0 0.0
  %1581 = vmatprep.subr.mxu0 0.0
  %1582 = vmatpush1.msra.mxu0 0.0
  %1583 = vmatprep.subr.mxu0 0.0
  %1584 = vmatpush1.msra.mxu0 0.0
  %1585 = vmatprep.subr.mxu0 0.0
  %1586 = vmatpush1.msra.mxu0 0.0
  %1587 = vmatprep.subr.mxu0 0.0
  %1588 = vmatpush1.msra.mxu0 0.0
  %1589 = vmatprep.subr.mxu0 0.0
  %1590 = vmatpush1.msra.mxu0 0.0
  %1591 = vmatprep.subr.mxu0 0.0
  %1592 = vmatpush1.msra.mxu0 0.0
  %1593 = vmatprep.subr.mxu0 0.0
  %1594 = vmatpush1.msra.mxu0 0.0
  %1595 = vmatprep.subr.mxu0 0.0
  %1596 = vmatpush1.msra.mxu0 0.0
  %1597 = vmatprep.subr.mxu0 0.0
  %1598 = vmatpush1.msra.mxu0 0.0
  %1599 = vmatprep.subr.mxu0 0.0
  %1600 = vmatpush1.msra.mxu0 0.0
  %1601 = vmatprep.subr.mxu0 0.0
  %1602 = vmatpush1.msra.mxu0 0.0
  %1603 = vmatprep.subr.mxu0 0.0
  %1604 = vmatpush1.msra.mxu0 0.0
  %1605 = vmatprep.subr.mxu0 0.0
  %1606 = vmatpush1.msra.mxu0 0.0
  %1607 = vmatprep.subr.mxu0 0.0
  %1608 = vmatpush1.msra.mxu0 %v1570
  %1609 = vmatprep.subr.mxu0 0.0
  %1610 = vmatpush1.msra.mxu0 %v1568
  %1611 = vmatprep.subr.mxu0 0.0
  %1612 = vmatpush2.msra.mxu0 0.0
  %1613 = vmatprep.subr.mxu0 0.0
  %1614 = vmatpush2.msra.mxu0 0.0
  %1615 = vmatprep.subr.mxu0 0.0
  %1616 = vmatpush2.msra.mxu0 0.0
  %1617 = vmatprep.subr.mxu0 0.0
  %1618 = vmatpush2.msra.mxu0 0.0
  %1619 = vmatprep.subr.mxu0 0.0
  %1620 = vmatpush2.msra.mxu0 0.0
  %1621 = vmatprep.subr.mxu0 0.0
  %1622 = vmatpush2.msra.mxu0 0.0
  %1623 = vmatprep.subr.mxu0 0.0
  %1624 = vmatpush2.msra.mxu0 0.0
  %1625 = vmatprep.subr.mxu0 0.0
  %1626 = vmatpush2.msra.mxu0 0.0
  %1627 = vmatprep.subr.mxu0 0.0
  %1628 = vmatpush2.msra.mxu0 0.0
  %1629 = vmatprep.subr.mxu0 0.0
  %1630 = vmatpush2.msra.mxu0 0.0
  %1631 = vmatprep.subr.mxu0 0.0
  %1632 = vmatpush2.msra.mxu0 0.0
  %1633 = vmatprep.subr.mxu0 0.0
  %1634 = vmatpush2.msra.mxu0 0.0
  %1635 = vmatprep.subr.mxu0 0.0
  %1636 = vmatpush2.msra.mxu0 0.0
  %1637 = vmatprep.subr.mxu0 0.0
  %1638 = vmatpush2.msra.mxu0 0.0
  %1639 = vmatprep.subr.mxu0 0.0
  %1640 = vmatpush2.msra.mxu0 0.0
  %1641 = vmatprep.subr.mxu0 0.0
  %1642 = vmatpush2.msra.mxu0 0.0
  %1643 = vmatprep.mubr.f32.mxu0 0.0
  %1644 = vmatmul.mubr.f32.gmra.mxu0 %v1574
  %v1645 = vpop.f32.mrf.mxu0
  %v1646 = vadd.f32 0.0, %v1645
  %v1647 = vpop.f32.mrf.mxu0
  %1648 = vmatprep.mubr.f32.mxu0 0.0
  %1649 = vmatmul.mubr.f32.gmra.mxu0 %v1577
  %v1650 = vpop.f32.mrf.mxu0
  %v1651 = vadd.f32 0.0, %v1650
  %v1652 = vpop.f32.mrf.mxu0
  %1653 = vdwg.mxu0
  %1654 = vrot.lane.b32.xlu0 %v1364, 116
  %v1655 = vpop.permute.xlu0 %1654
  %1657 = vrot.lane.b32.xlu0 %v1371, 116
  %v1658 = vpop.permute.xlu0 %1657
  %v1661 = vsel %vm18, %v1646, 0
  %v1664 = vsel %vm18, %v1651, 0
  %v1666 = vsel %vm25, %v1655, 0
  %1668 = vmatprep.subr.mxu0 0.0
  %1669 = vmatpush1.msra.mxu0 0.0
  %1670 = vmatprep.subr.mxu0 0.0
  %1671 = vmatpush1.msra.mxu0 0.0
  %1672 = vmatprep.subr.mxu0 0.0
  %1673 = vmatpush1.msra.mxu0 0.0
  %1674 = vmatprep.subr.mxu0 0.0
  %1675 = vmatpush1.msra.mxu0 0.0
  %1676 = vmatprep.subr.mxu0 0.0
  %1677 = vmatpush1.msra.mxu0 0.0
  %1678 = vmatprep.subr.mxu0 0.0
  %1679 = vmatpush1.msra.mxu0 0.0
  %1680 = vmatprep.subr.mxu0 0.0
  %1681 = vmatpush1.msra.mxu0 0.0
  %1682 = vmatprep.subr.mxu0 0.0
  %1683 = vmatpush1.msra.mxu0 0.0
  %1684 = vmatprep.subr.mxu0 0.0
  %1685 = vmatpush1.msra.mxu0 0.0
  %1686 = vmatprep.subr.mxu0 0.0
  %1687 = vmatpush1.msra.mxu0 0.0
  %1688 = vmatprep.subr.mxu0 0.0
  %1689 = vmatpush1.msra.mxu0 0.0
  %1690 = vmatprep.subr.mxu0 0.0
  %1691 = vmatpush1.msra.mxu0 0.0
  %1692 = vmatprep.subr.mxu0 0.0
  %1693 = vmatpush1.msra.mxu0 0.0
  %1694 = vmatprep.subr.mxu0 0.0
  %1695 = vmatpush1.msra.mxu0 0.0
  %1696 = vmatprep.subr.mxu0 0.0
  %1697 = vmatpush1.msra.mxu0 0.0
  %1698 = vmatprep.subr.mxu0 0.0
  %1699 = vmatpush1.msra.mxu0 %v1666
  %1700 = vmatprep.subr.mxu0 0.0
  %1701 = vmatpush2.msra.mxu0 0.0
  %1702 = vmatprep.subr.mxu0 0.0
  %1703 = vmatpush2.msra.mxu0 0.0
  %1704 = vmatprep.subr.mxu0 0.0
  %1705 = vmatpush2.msra.mxu0 0.0
  %1706 = vmatprep.subr.mxu0 0.0
  %1707 = vmatpush2.msra.mxu0 0.0
  %1708 = vmatprep.subr.mxu0 0.0
  %1709 = vmatpush2.msra.mxu0 0.0
  %1710 = vmatprep.subr.mxu0 0.0
  %1711 = vmatpush2.msra.mxu0 0.0
  %1712 = vmatprep.subr.mxu0 0.0
  %1713 = vmatpush2.msra.mxu0 0.0
  %1714 = vmatprep.subr.mxu0 0.0
  %1715 = vmatpush2.msra.mxu0 0.0
  %1716 = vmatprep.subr.mxu0 0.0
  %1717 = vmatpush2.msra.mxu0 0.0
  %1718 = vmatprep.subr.mxu0 0.0
  %1719 = vmatpush2.msra.mxu0 0.0
  %1720 = vmatprep.subr.mxu0 0.0
  %1721 = vmatpush2.msra.mxu0 0.0
  %1722 = vmatprep.subr.mxu0 0.0
  %1723 = vmatpush2.msra.mxu0 0.0
  %1724 = vmatprep.subr.mxu0 0.0
  %1725 = vmatpush2.msra.mxu0 0.0
  %1726 = vmatprep.subr.mxu0 0.0
  %1727 = vmatpush2.msra.mxu0 0.0
  %1728 = vmatprep.subr.mxu0 0.0
  %1729 = vmatpush2.msra.mxu0 0.0
  %1730 = vmatprep.subr.mxu0 0.0
  %1731 = vmatpush2.msra.mxu0 0.0
  %1732 = vmatprep.mubr.f32.mxu0 0.0
  %1733 = vmatmul.mubr.f32.gmra.mxu0 %v1661
  %v1734 = vpop.f32.mrf.mxu0
  %v1735 = vadd.f32 %v1658, %v1734
  %v1736 = vpop.f32.mrf.mxu0
  %1737 = vmatprep.mubr.f32.mxu0 0.0
  %1738 = vmatmul.mubr.f32.gmra.mxu0 %v1664
  %v1739 = vpop.f32.mrf.mxu0
  %v1740 = vadd.f32 %v1658, %v1739
  %v1741 = vpop.f32.mrf.mxu0
  %1742 = vdwg.mxu0
  %v1743 = vadd.f32 %v1362, %v1735
  %v1744 = vadd.f32 %v1363, %v1740
  %v1745 = vsel %vm18, %v1743, 0.0
  %1746 = vadd.xlane.f32.xlu0 %v1745
  %v1747 = vpop.xlane.xlu0 %1746
  %v1748 = vsel %vm18, %v1744, 0.0
  %1749 = vadd.xlane.f32.xlu0 %v1748
  %v1750 = vpop.xlane.xlu0 %1749
  %v1751 = vmul.f32 %v1747, %v492
  %v1752 = vmul.f32 %v1750, %v492
  %v1753 = vsub.f32 %v1743, %v1751
  %v1754 = vsub.f32 %v1744, %v1752
  %v1755 = vmul.f32 %v1753, %v1753
  %v1756 = vmul.f32 %v1754, %v1754
  %v1757 = vsel %vm18, %v1755, 0.0
  %1758 = vadd.xlane.f32.xlu0 %v1757
  %v1759 = vpop.xlane.xlu0 %1758
  %v1760 = vsel %vm18, %v1756, 0.0
  %1761 = vadd.xlane.f32.xlu0 %v1760
  %v1762 = vpop.xlane.xlu0 %1761
  %v1763 = vmul.f32 %v1759, %v492
  %v1764 = vmul.f32 %v1762, %v492
  %v1765 = vadd.f32 %v1763, 1e-05
  %v1766 = vadd.f32 %v1764, 1e-05
  %v1767 = vrsqrt.pop %v1765
  %v1768 = vrsqrt.pop %v1766
  %v1769 = vmul.f32 %v1753, %v1767
  %v1770 = vmul.f32 %v1754, %v1768
  %1771 = vrot.lane.b32.xlu0 %v1371, 92
  %v1772 = vpop.permute.xlu0 %1771
  %v1774 = vmul.f32 %v1769, %v1772
  %v1775 = vmul.f32 %v1770, %v1772
  %1776 = vrot.lane.b32.xlu0 %v1371, 88
  %v1777 = vpop.permute.xlu0 %1776
  %v1779 = vadd.f32 %v1774, %v1777
  %v1780 = vadd.f32 %v1775, %v1777
  %1781 = vrot.lane.b32.xlu0 %v1364, 112
  %v1782 = vpop.permute.xlu0 %1781
  %1783 = vrot.lane.b32.xlu0 %v1371, 112
  %v1784 = vpop.permute.xlu0 %1783
  %v1787 = vsel %vm18, %v1779, 0
  %v1790 = vsel %vm18, %v1780, 0
  %v1792 = vsel %vm25, %v1782, 0
  %1794 = vmatprep.subr.mxu0 0.0
  %1795 = vmatpush1.msra.mxu0 0.0
  %1796 = vmatprep.subr.mxu0 0.0
  %1797 = vmatpush1.msra.mxu0 0.0
  %1798 = vmatprep.subr.mxu0 0.0
  %1799 = vmatpush1.msra.mxu0 0.0
  %1800 = vmatprep.subr.mxu0 0.0
  %1801 = vmatpush1.msra.mxu0 0.0
  %1802 = vmatprep.subr.mxu0 0.0
  %1803 = vmatpush1.msra.mxu0 0.0
  %1804 = vmatprep.subr.mxu0 0.0
  %1805 = vmatpush1.msra.mxu0 0.0
  %1806 = vmatprep.subr.mxu0 0.0
  %1807 = vmatpush1.msra.mxu0 0.0
  %1808 = vmatprep.subr.mxu0 0.0
  %1809 = vmatpush1.msra.mxu0 0.0
  %1810 = vmatprep.subr.mxu0 0.0
  %1811 = vmatpush1.msra.mxu0 0.0
  %1812 = vmatprep.subr.mxu0 0.0
  %1813 = vmatpush1.msra.mxu0 0.0
  %1814 = vmatprep.subr.mxu0 0.0
  %1815 = vmatpush1.msra.mxu0 0.0
  %1816 = vmatprep.subr.mxu0 0.0
  %1817 = vmatpush1.msra.mxu0 0.0
  %1818 = vmatprep.subr.mxu0 0.0
  %1819 = vmatpush1.msra.mxu0 0.0
  %1820 = vmatprep.subr.mxu0 0.0
  %1821 = vmatpush1.msra.mxu0 0.0
  %1822 = vmatprep.subr.mxu0 0.0
  %1823 = vmatpush1.msra.mxu0 0.0
  %1824 = vmatprep.subr.mxu0 0.0
  %1825 = vmatpush1.msra.mxu0 %v1792
  %1826 = vmatprep.subr.mxu0 0.0
  %1827 = vmatpush2.msra.mxu0 0.0
  %1828 = vmatprep.subr.mxu0 0.0
  %1829 = vmatpush2.msra.mxu0 0.0
  %1830 = vmatprep.subr.mxu0 0.0
  %1831 = vmatpush2.msra.mxu0 0.0
  %1832 = vmatprep.subr.mxu0 0.0
  %1833 = vmatpush2.msra.mxu0 0.0
  %1834 = vmatprep.subr.mxu0 0.0
  %1835 = vmatpush2.msra.mxu0 0.0
  %1836 = vmatprep.subr.mxu0 0.0
  %1837 = vmatpush2.msra.mxu0 0.0
  %1838 = vmatprep.subr.mxu0 0.0
  %1839 = vmatpush2.msra.mxu0 0.0
  %1840 = vmatprep.subr.mxu0 0.0
  %1841 = vmatpush2.msra.mxu0 0.0
  %1842 = vmatprep.subr.mxu0 0.0
  %1843 = vmatpush2.msra.mxu0 0.0
  %1844 = vmatprep.subr.mxu0 0.0
  %1845 = vmatpush2.msra.mxu0 0.0
  %1846 = vmatprep.subr.mxu0 0.0
  %1847 = vmatpush2.msra.mxu0 0.0
  %1848 = vmatprep.subr.mxu0 0.0
  %1849 = vmatpush2.msra.mxu0 0.0
  %1850 = vmatprep.subr.mxu0 0.0
  %1851 = vmatpush2.msra.mxu0 0.0
  %1852 = vmatprep.subr.mxu0 0.0
  %1853 = vmatpush2.msra.mxu0 0.0
  %1854 = vmatprep.subr.mxu0 0.0
  %1855 = vmatpush2.msra.mxu0 0.0
  %1856 = vmatprep.subr.mxu0 0.0
  %1857 = vmatpush2.msra.mxu0 0.0
  %1858 = vmatprep.mubr.f32.mxu0 0.0
  %1859 = vmatmul.mubr.f32.gmra.mxu0 %v1787
  %v1860 = vpop.f32.mrf.mxu0
  %v1861 = vadd.f32 %v1784, %v1860
  %v1862 = vpop.f32.mrf.mxu0
  %1863 = vmatprep.mubr.f32.mxu0 0.0
  %1864 = vmatmul.mubr.f32.gmra.mxu0 %v1790
  %v1865 = vpop.f32.mrf.mxu0
  %v1866 = vadd.f32 %v1784, %v1865
  %v1867 = vpop.f32.mrf.mxu0
  %1868 = vdwg.mxu0
  %v1869 = vmax.f32 %v1861, 0.0
  %v1870 = vmax.f32 %v1866, 0.0
  %1871 = vrot.lane.b32.xlu0 %v1371, 96
  %v1872 = vpop.permute.xlu0 %1871
  %v1875 = vsel %vm285, %v1869, 0
  %v1878 = vsel %vm285, %v1870, 0
  %1880 = vmatprep.subr.mxu0 0.0
  %1881 = vmatpush1.msra.mxu0 0.0
  %1882 = vmatprep.subr.mxu0 0.0
  %1883 = vmatpush1.msra.mxu0 0.0
  %1884 = vmatprep.subr.mxu0 0.0
  %1885 = vmatpush1.msra.mxu0 0.0
  %1886 = vmatprep.subr.mxu0 0.0
  %1887 = vmatpush1.msra.mxu0 0.0
  %1888 = vmatprep.subr.mxu0 0.0
  %1889 = vmatpush1.msra.mxu0 0.0
  %1890 = vmatprep.subr.mxu0 0.0
  %1891 = vmatpush1.msra.mxu0 0.0
  %1892 = vmatprep.subr.mxu0 0.0
  %1893 = vmatpush1.msra.mxu0 0.0
  %1894 = vmatprep.subr.mxu0 0.0
  %1895 = vmatpush1.msra.mxu0 0.0
  %1896 = vmatprep.subr.mxu0 0.0
  %1897 = vmatpush1.msra.mxu0 0.0
  %1898 = vmatprep.subr.mxu0 0.0
  %1899 = vmatpush1.msra.mxu0 0.0
  %1900 = vmatprep.subr.mxu0 0.0
  %1901 = vmatpush1.msra.mxu0 0.0
  %1902 = vmatprep.subr.mxu0 0.0
  %1903 = vmatpush1.msra.mxu0 0.0
  %1904 = vmatprep.subr.mxu0 0.0
  %1905 = vmatpush1.msra.mxu0 0.0
  %1906 = vmatprep.subr.mxu0 0.0
  %1907 = vmatpush1.msra.mxu0 0.0
  %1908 = vmatprep.subr.mxu0 0.0
  %1909 = vmatpush1.msra.mxu0 %v1366
  %1910 = vmatprep.subr.mxu0 0.0
  %1911 = vmatpush1.msra.mxu0 %v1365
  %1912 = vmatprep.subr.mxu0 0.0
  %1913 = vmatpush2.msra.mxu0 0.0
  %1914 = vmatprep.subr.mxu0 0.0
  %1915 = vmatpush2.msra.mxu0 0.0
  %1916 = vmatprep.subr.mxu0 0.0
  %1917 = vmatpush2.msra.mxu0 0.0
  %1918 = vmatprep.subr.mxu0 0.0
  %1919 = vmatpush2.msra.mxu0 0.0
  %1920 = vmatprep.subr.mxu0 0.0
  %1921 = vmatpush2.msra.mxu0 0.0
  %1922 = vmatprep.subr.mxu0 0.0
  %1923 = vmatpush2.msra.mxu0 0.0
  %1924 = vmatprep.subr.mxu0 0.0
  %1925 = vmatpush2.msra.mxu0 0.0
  %1926 = vmatprep.subr.mxu0 0.0
  %1927 = vmatpush2.msra.mxu0 0.0
  %1928 = vmatprep.subr.mxu0 0.0
  %1929 = vmatpush2.msra.mxu0 0.0
  %1930 = vmatprep.subr.mxu0 0.0
  %1931 = vmatpush2.msra.mxu0 0.0
  %1932 = vmatprep.subr.mxu0 0.0
  %1933 = vmatpush2.msra.mxu0 0.0
  %1934 = vmatprep.subr.mxu0 0.0
  %1935 = vmatpush2.msra.mxu0 0.0
  %1936 = vmatprep.subr.mxu0 0.0
  %1937 = vmatpush2.msra.mxu0 0.0
  %1938 = vmatprep.subr.mxu0 0.0
  %1939 = vmatpush2.msra.mxu0 0.0
  %1940 = vmatprep.subr.mxu0 0.0
  %1941 = vmatpush2.msra.mxu0 0.0
  %1942 = vmatprep.subr.mxu0 0.0
  %1943 = vmatpush2.msra.mxu0 0.0
  %1944 = vmatprep.mubr.f32.mxu0 0.0
  %1945 = vmatmul.mubr.f32.gmra.mxu0 %v1875
  %v1946 = vpop.f32.mrf.mxu0
  %v1947 = vadd.f32 %v1872, %v1946
  %v1948 = vpop.f32.mrf.mxu0
  %1949 = vmatprep.mubr.f32.mxu0 0.0
  %1950 = vmatmul.mubr.f32.gmra.mxu0 %v1878
  %v1951 = vpop.f32.mrf.mxu0
  %v1952 = vadd.f32 %v1872, %v1951
  %v1953 = vpop.f32.mrf.mxu0
  %1954 = vdwg.mxu0
  %v1955 = vadd.f32 %v1779, %v1947
  %v1956 = vadd.f32 %v1780, %v1952
  %v1957 = vsel %vm18, %v1955, 0.0
  %1958 = vadd.xlane.f32.xlu0 %v1957
  %v1959 = vpop.xlane.xlu0 %1958
  %v1960 = vsel %vm18, %v1956, 0.0
  %1961 = vadd.xlane.f32.xlu0 %v1960
  %v1962 = vpop.xlane.xlu0 %1961
  %v1963 = vmul.f32 %v1959, %v492
  %v1964 = vmul.f32 %v1962, %v492
  %v1965 = vsub.f32 %v1955, %v1963
  %v1966 = vsub.f32 %v1956, %v1964
  %v1967 = vmul.f32 %v1965, %v1965
  %v1968 = vmul.f32 %v1966, %v1966
  %v1969 = vsel %vm18, %v1967, 0.0
  %1970 = vadd.xlane.f32.xlu0 %v1969
  %v1971 = vpop.xlane.xlu0 %1970
  %v1972 = vsel %vm18, %v1968, 0.0
  %1973 = vadd.xlane.f32.xlu0 %v1972
  %v1974 = vpop.xlane.xlu0 %1973
  %v1975 = vmul.f32 %v1971, %v492
  %v1976 = vmul.f32 %v1974, %v492
  %v1977 = vadd.f32 %v1975, 1e-05
  %v1978 = vadd.f32 %v1976, 1e-05
  %v1979 = vrsqrt.pop %v1977
  %v1980 = vrsqrt.pop %v1978
  %v1981 = vmul.f32 %v1965, %v1979
  %v1982 = vmul.f32 %v1966, %v1980
  %1983 = vrot.lane.b32.xlu0 %v1371, 84
  %v1984 = vpop.permute.xlu0 %1983
  %v1986 = vmul.f32 %v1981, %v1984
  %v1987 = vmul.f32 %v1982, %v1984
  %1988 = vrot.lane.b32.xlu0 %v1371, 80
  %v1989 = vpop.permute.xlu0 %1988
  %v1991 = vadd.f32 %v1986, %v1989
  %v1992 = vadd.f32 %v1987, %v1989
  %v1993 = vld [vmem:[%s1 + $0x78] sm:$0xff]
  %v1994 = vlaneseq
  %v1995 = vshrl.u32 %v1994, 7
  %v1996 = vsub.s32 4, %v1995
  %v1997 = vrot.slane %v1993, %v1996
  %v1999 = vsel %vm18, %v1991, 0
  %v2002 = vsel %vm18, %v1992, 0
  %v2005 = vsel %vm25, %v1993, 0
  %2007 = vmatprep.subr.mxu0 0.0
  %2008 = vmatpush1.msra.mxu0 0.0
  %2009 = vmatprep.subr.mxu0 0.0
  %2010 = vmatpush1.msra.mxu0 0.0
  %2011 = vmatprep.subr.mxu0 0.0
  %2012 = vmatpush1.msra.mxu0 0.0
  %2013 = vmatprep.subr.mxu0 0.0
  %2014 = vmatpush1.msra.mxu0 0.0
  %2015 = vmatprep.subr.mxu0 0.0
  %2016 = vmatpush1.msra.mxu0 0.0
  %2017 = vmatprep.subr.mxu0 0.0
  %2018 = vmatpush1.msra.mxu0 0.0
  %2019 = vmatprep.subr.mxu0 0.0
  %2020 = vmatpush1.msra.mxu0 0.0
  %2021 = vmatprep.subr.mxu0 0.0
  %2022 = vmatpush1.msra.mxu0 0.0
  %2023 = vmatprep.subr.mxu0 0.0
  %2024 = vmatpush1.msra.mxu0 0.0
  %2025 = vmatprep.subr.mxu0 0.0
  %2026 = vmatpush1.msra.mxu0 0.0
  %2027 = vmatprep.subr.mxu0 0.0
  %2028 = vmatpush1.msra.mxu0 0.0
  %2029 = vmatprep.subr.mxu0 0.0
  %2030 = vmatpush1.msra.mxu0 0.0
  %2031 = vmatprep.subr.mxu0 0.0
  %2032 = vmatpush1.msra.mxu0 0.0
  %2033 = vmatprep.subr.mxu0 0.0
  %2034 = vmatpush1.msra.mxu0 0.0
  %2035 = vmatprep.subr.mxu0 0.0
  %2036 = vmatpush1.msra.mxu0 0.0
  %2037 = vmatprep.subr.mxu0 0.0
  %2038 = vmatpush1.msra.mxu0 %v2005
  %2039 = vmatprep.subr.mxu0 0.0
  %2040 = vmatpush2.msra.mxu0 0.0
  %2041 = vmatprep.subr.mxu0 0.0
  %2042 = vmatpush2.msra.mxu0 0.0
  %2043 = vmatprep.subr.mxu0 0.0
  %2044 = vmatpush2.msra.mxu0 0.0
  %2045 = vmatprep.subr.mxu0 0.0
  %2046 = vmatpush2.msra.mxu0 0.0
  %2047 = vmatprep.subr.mxu0 0.0
  %2048 = vmatpush2.msra.mxu0 0.0
  %2049 = vmatprep.subr.mxu0 0.0
  %2050 = vmatpush2.msra.mxu0 0.0
  %2051 = vmatprep.subr.mxu0 0.0
  %2052 = vmatpush2.msra.mxu0 0.0
  %2053 = vmatprep.subr.mxu0 0.0
  %2054 = vmatpush2.msra.mxu0 0.0
  %2055 = vmatprep.subr.mxu0 0.0
  %2056 = vmatpush2.msra.mxu0 0.0
  %2057 = vmatprep.subr.mxu0 0.0
  %2058 = vmatpush2.msra.mxu0 0.0
  %2059 = vmatprep.subr.mxu0 0.0
  %2060 = vmatpush2.msra.mxu0 0.0
  %2061 = vmatprep.subr.mxu0 0.0
  %2062 = vmatpush2.msra.mxu0 0.0
  %2063 = vmatprep.subr.mxu0 0.0
  %2064 = vmatpush2.msra.mxu0 0.0
  %2065 = vmatprep.subr.mxu0 0.0
  %2066 = vmatpush2.msra.mxu0 0.0
  %2067 = vmatprep.subr.mxu0 0.0
  %2068 = vmatpush2.msra.mxu0 0.0
  %2069 = vmatprep.subr.mxu0 0.0
  %2070 = vmatpush2.msra.mxu0 0.0
  %2071 = vmatprep.mubr.f32.mxu0 0.0
  %2072 = vmatmul.mubr.f32.gmra.mxu0 %v1999
  %v2073 = vpop.f32.mrf.mxu0
  %v2074 = vadd.f32 %v1997, %v2073
  %v2075 = vpop.f32.mrf.mxu0
  %2076 = vmatprep.mubr.f32.mxu0 0.0
  %2077 = vmatmul.mubr.f32.gmra.mxu0 %v2002
  %v2078 = vpop.f32.mrf.mxu0
  %v2079 = vadd.f32 %v1997, %v2078
  %v2080 = vpop.f32.mrf.mxu0
  %2081 = vdwg.mxu0
  %vm2082 = vcmp.ge.f32.partialorder %v2074, 0.0
  %vm2083 = vcmp.ge.f32.partialorder %v2079, 0.0
  %v2084 = vmul.f32 %v2074, 0.01
  %v2085 = vmul.f32 %v2079, 0.01
  %v2086 = vsel %vm2082, %v2074, %v2084
  %v2087 = vsel %vm2083, %v2079, %v2085
  %2088 = vset.pattern.permute.xlu0 0
  %2089 = vperm.xlu0 %2088, %v1993
  %v2090 = vpop.permute.xlu0 %2089
  %v2091 = vrot.slane %v1993, 5
  %v2092 = vrot.slane %v2090, 6
  %vm2094 = vcmask 39936
  %v2095 = vsel %vm2094, %v2091, 0
  %v2098 = vsel %vm2094, %v2086, 0
  %v2101 = vsel %vm2094, %v2087, 0
  %2103 = vmatprep.subr.mxu0 0.0
  %2104 = vmatpush1.xpose.msra.mxu0 0.0
  %2105 = vmatprep.subr.mxu0 0.0
  %2106 = vmatpush1.xpose.msra.mxu0 0.0
  %2107 = vmatprep.subr.mxu0 0.0
  %2108 = vmatpush1.xpose.msra.mxu0 0.0
  %2109 = vmatprep.subr.mxu0 0.0
  %2110 = vmatpush1.xpose.msra.mxu0 0.0
  %2111 = vmatprep.subr.mxu0 0.0
  %2112 = vmatpush1.xpose.msra.mxu0 0.0
  %2113 = vmatprep.subr.mxu0 0.0
  %2114 = vmatpush1.xpose.msra.mxu0 0.0
  %2115 = vmatprep.subr.mxu0 0.0
  %2116 = vmatpush1.xpose.msra.mxu0 0.0
  %2117 = vmatprep.subr.mxu0 0.0
  %2118 = vmatpush1.xpose.msra.mxu0 0.0
  %2119 = vmatprep.subr.mxu0 0.0
  %2120 = vmatpush1.xpose.msra.mxu0 0.0
  %2121 = vmatprep.subr.mxu0 0.0
  %2122 = vmatpush1.xpose.msra.mxu0 0.0
  %2123 = vmatprep.subr.mxu0 0.0
  %2124 = vmatpush1.xpose.msra.mxu0 0.0
  %2125 = vmatprep.subr.mxu0 0.0
  %2126 = vmatpush1.xpose.msra.mxu0 0.0
  %2127 = vmatprep.subr.mxu0 0.0
  %2128 = vmatpush1.xpose.msra.mxu0 0.0
  %2129 = vmatprep.subr.mxu0 0.0
  %2130 = vmatpush1.xpose.msra.mxu0 0.0
  %2131 = vmatprep.subr.mxu0 0.0
  %2132 = vmatpush1.xpose.msra.mxu0 %v2101
  %2133 = vmatprep.subr.mxu0 0.0
  %2134 = vmatpush1.xpose.msra.mxu0 %v2098
  %2135 = vmatprep.subr.mxu0 0.0
  %2136 = vmatpush2.xpose.msra.mxu0 0.0
  %2137 = vmatprep.subr.mxu0 0.0
  %2138 = vmatpush2.xpose.msra.mxu0 0.0
  %2139 = vmatprep.subr.mxu0 0.0
  %2140 = vmatpush2.xpose.msra.mxu0 0.0
  %2141 = vmatprep.subr.mxu0 0.0
  %2142 = vmatpush2.xpose.msra.mxu0 0.0
  %2143 = vmatprep.subr.mxu0 0.0
  %2144 = vmatpush2.xpose.msra.mxu0 0.0
  %2145 = vmatprep.subr.mxu0 0.0
  %2146 = vmatpush2.xpose.msra.mxu0 0.0
  %2147 = vmatprep.subr.mxu0 0.0
  %2148 = vmatpush2.xpose.msra.mxu0 0.0
  %2149 = vmatprep.subr.mxu0 0.0
  %2150 = vmatpush2.xpose.msra.mxu0 0.0
  %2151 = vmatprep.subr.mxu0 0.0
  %2152 = vmatpush2.xpose.msra.mxu0 0.0
  %2153 = vmatprep.subr.mxu0 0.0
  %2154 = vmatpush2.xpose.msra.mxu0 0.0
  %2155 = vmatprep.subr.mxu0 0.0
  %2156 = vmatpush2.xpose.msra.mxu0 0.0
  %2157 = vmatprep.subr.mxu0 0.0
  %2158 = vmatpush2.xpose.msra.mxu0 0.0
  %2159 = vmatprep.subr.mxu0 0.0
  %2160 = vmatpush2.xpose.msra.mxu0 0.0
  %2161 = vmatprep.subr.mxu0 0.0
  %2162 = vmatpush2.xpose.msra.mxu0 0.0
  %2163 = vmatprep.subr.mxu0 0.0
  %2164 = vmatpush2.xpose.msra.mxu0 0.0
  %2165 = vmatprep.subr.mxu0 0.0
  %2166 = vmatpush2.xpose.msra.mxu0 0.0
  %2167 = vmatprep.mubr.f32.mxu0 0.0
  %2168 = vmatmul.mubr.f32.gmra.mxu0 %v2095
  %v2169 = vpop.f32.mrf.mxu0
  %v2170 = vadd.f32 %v2092, %v2169
  %v2171 = vpop.f32.mrf.mxu0
  %2172 = vdwg.mxu0
  %vm2173 = vcmask 122880
  %2174 = vst.msk [vmem:[%s2] sm:$0x1] %vm2173, %v2170
  // Predicated region
  $region10: #{_forward_jit.1} parent=0 // pred_check
    _
  $region11: #{_forward_jit.1} parent=0 // pred_check_branch
    %2176 = sbr.rel (0) target = $region13
  $region12: #{_forward_jit.1} parent=0 // pred_region
    _
  $region13: #{_forward_jit.1} parent=0 // pred_fallthru
    _
  // Predicated region
  $region14: #{_forward_jit.1} parent=0 // pred_check
    _
  $region15: #{_forward_jit.1} parent=0 // pred_check_branch
    %2178 = sbr.rel (0) target = $region17
  $region16: #{_forward_jit.1} parent=0 // pred_region
    _
  $region17: #{_forward_jit.1} parent=0 // pred_fallthru
    _

</llo_original>
